<compile_context>
chip_gen: v6e
topology: v6e:2x2x1
jax: 0.10.0
libtpu: 0.0.40
codegen_flags: <defaults>
</compile_context>

<pallas_src>
import functools

import jax
import jax.numpy as jnp
from jax import lax
from jax.experimental import pallas as pl
from jax.experimental.pallas import tpu as pltpu


def gcn_kernel(depth, block_n, compute_dtype,
               xb_ref, adj_ref,
               w1h_ref, w2_ref, b2_ref,
               wo1_ref, bo1_ref,
               wo2_ref, bo2_ref,
               out_ref,
               h_scr, acc_scr, nei_scr):
    d = pl.program_id(0)                 # depth step   (outer, recurrent)
    i = pl.program_id(1)                 # row block    (inner)
    tn = block_n
    hp = h_scr.shape[2]

    write_slot = d % 2                   # messages produced at depth d
    read_slot = 1 - write_slot           # messages from depth d-1

    row0 = pl.multiple_of(i * tn, tn)
    # messages[0, :] = 0 after every update (global row 0 only).
    grow = row0 + lax.broadcasted_iota(jnp.int32, (tn, 1), 0)
    keep = (grow != 0).astype(jnp.float32)

    # neighbour gather + sum as a single MXU matmul; skipped at depth 0 where the
    # previous messages are identically zero (saves one N^2*H matmul + zero-init).
    @pl.when(d == 0)
    def _():
        nei_scr[...] = jnp.zeros((tn, hp), jnp.float32)

    @pl.when(d > 0)
    def _():
        nei_scr[...] = jnp.dot(adj_ref[...], h_scr[read_slot],
                               preferred_element_type=jnp.float32)

    # W_g: Linear(D+H, H) -> ReLU -> Linear(H, H); the fmess part of the first
    # Linear (+ its bias) was hoisted to the wrapper and arrives as xb_ref (f32).
    pre = (xb_ref[...]
           + jnp.dot(nei_scr[...].astype(compute_dtype), w1h_ref[...],
                     preferred_element_type=jnp.float32))
    h1 = jnp.maximum(pre, 0.0)
    tmp = (jnp.dot(h1.astype(compute_dtype), w2_ref[...],
                   preferred_element_type=jnp.float32)
           + b2_ref[...])
    tmp = tmp * keep                                     # row-0 zeroing (aliased layer)

    # new messages for depth d+1 (ping-pong slot)
    h_scr[write_slot, pl.ds(row0, tn), :] = tmp.astype(h_scr.dtype)

    # output_mess Linear-1 accumulated over depth (the depth*H concat never exists)
    contrib = jnp.dot(tmp.astype(compute_dtype), wo1_ref[...],
                      preferred_element_type=jnp.float32)               # (tn, Mp)

    @pl.when(d == 0)
    def _():
        acc_scr[pl.ds(row0, tn), :] = contrib

    @pl.when(d > 0)
    def _():
        acc_scr[pl.ds(row0, tn), :] += contrib

    # last depth pass: finish output_mess and emit the lane-dense output block
    @pl.when(d == depth - 1)
    def _():
        o1 = jnp.maximum(acc_scr[pl.ds(row0, tn), :] + bo1_ref[...], 0.0)
        o = (jnp.dot(o1.astype(compute_dtype), wo2_ref[...],
                     preferred_element_type=jnp.float32)
             + bo2_ref[...])
        out_ref[...] = (o * keep).astype(out_ref.dtype)


def _round_up(v, m):
    return ((v + m - 1) // m) * m


def _pad2(x, rows, cols, dtype):
    out = jnp.zeros((rows, cols), dtype)
    return out.at[: x.shape[0], : x.shape[1]].set(x.astype(dtype))


def gcn_forward(fmess, mess_graph, params, depth, *,
                block_n=128, compute_dtype=jnp.float32):
    """Pallas equivalent of GCN.forward(fmess, mess_graph) with mask=None."""
    N, D = fmess.shape
    K = mess_graph.shape[1] if mess_graph.ndim == 2 else 0
    H = params["Wg2_w"].shape[0]
    M = params["Wo1_w"].shape[0]                 # int(depth / 2) * hidden_size

    block_n = max(8, _round_up(min(block_n, _round_up(N, 8)), 8))
    Np = _round_up(N, block_n)
    Hp = _round_up(H, 128)
    Mp = _round_up(M, 128)
    nb = Np // block_n
    cdt = compute_dtype
    csz = jnp.dtype(cdt).itemsize

    # Dense neighbour-count matrix: A[i, j] = #{k : mess_graph[i, k] == j}.
    # Counts are small integers (exact in bf16); padded rows/cols stay zero, and a
    # K == 0 graph degenerates to A == 0 (matching the torch zeros branch).
    if K > 0:
        rows = jnp.repeat(jnp.arange(N, dtype=jnp.int32), K)
        cols = mess_graph.astype(jnp.int32).reshape(-1)
        adj = jnp.zeros((Np, Np), jnp.float32).at[rows, cols].add(1.0)
    else:
        adj = jnp.zeros((Np, Np), jnp.float32)
    adj = adj.astype(cdt)

    w1 = params["Wg1_w"]                                     # (H, D + H)
    # Depth-invariant input projection hoisted out of the depth loop: one XLA
    # matmul instead of `depth` identical in-kernel matmuls over fmess.
    xb = (fmess.astype(jnp.float32) @ w1[:, :D].T.astype(jnp.float32)
          + params["Wg1_b"].astype(jnp.float32))             # (N, H) f32
    xb_p = _pad2(xb, Np, Hp, jnp.float32)

    w1h = _pad2(w1[:, D:].T, Hp, Hp, cdt)
    w2 = _pad2(params["Wg2_w"].T, Hp, Hp, cdt)
    b2 = _pad2(params["Wg2_b"].reshape(1, H), 1, Hp, jnp.float32)

    # output_mess Linear-1, re-laid out as one lane-dense (Hp, Mp) slice per depth
    wo1 = jnp.zeros((depth * Hp, Mp), cdt)
    for l in range(depth):
        blk = params["Wo1_w"][:, l * H:(l + 1) * H].T        # (H, M)
        wo1 = wo1.at[l * Hp: l * Hp + H, :M].set(blk.astype(cdt))
    bo1 = _pad2(params["Wo1_b"].reshape(1, M), 1, Mp, jnp.float32)
    wo2 = _pad2(params["Wo2_w"].T, Mp, Hp, cdt)
    bo2 = _pad2(params["Wo2_b"].reshape(1, H), 1, Hp, jnp.float32)

    # resident-VMEM estimate: double-buffered streamed blocks + weights + scratch
    stream = (2 * (block_n * Hp * 4          # xb block (f32)
                   + block_n * Np * csz      # adjacency block
                   + Hp * Mp * csz           # W_o1 depth slice
                   + block_n * Hp * 4)       # output block
              + 2 * (2 * Hp * Hp + Mp * Hp) * csz
              + 2 * (2 * Hp + Mp) * 4)
    scratch = 2 * Np * Hp * csz + Np * Mp * 4 + block_n * Hp * 4
    vmem_limit = int(min(60 * 2**20, max(16 * 2**20, stream + scratch + (4 << 20))))

    flops = int(depth * (2 * Np * Np * Hp + 4 * Np * Hp * Hp + 2 * Np * Hp * Mp)
                + 2 * Np * Mp * Hp + 2 * Np * D * Hp)
    bytes_accessed = int(depth * (Np * Np * csz + Np * Hp * 4)
                         + (2 * Hp * Hp + depth * Hp * Mp + Mp * Hp) * csz
                         + (2 * Hp + Mp) * 4
                         + depth * Np * Hp * 4)

    kernel = functools.partial(gcn_kernel, depth, block_n, cdt)

    grid_spec = pltpu.PrefetchScalarGridSpec(
        num_scalar_prefetch=0,
        grid=(depth, nb),                     # depth outer (recurrent), row blocks inner
        in_specs=[
            pl.BlockSpec((block_n, Hp), lambda d, i: (i, 0)),    # xb block (f32)
            pl.BlockSpec((block_n, Np), lambda d, i: (i, 0)),    # neighbour counts block
            pl.BlockSpec((Hp, Hp), lambda d, i: (0, 0)),         # W_g1 | nei part
            pl.BlockSpec((Hp, Hp), lambda d, i: (0, 0)),         # W_g2
            pl.BlockSpec((1, Hp), lambda d, i: (0, 0)),          # b_g2
            pl.BlockSpec((Hp, Mp), lambda d, i: (d, 0)),         # W_o1, depth-d slice
            pl.BlockSpec((1, Mp), lambda d, i: (0, 0)),          # b_o1
            pl.BlockSpec((Mp, Hp), lambda d, i: (0, 0)),         # W_o2
            pl.BlockSpec((1, Hp), lambda d, i: (0, 0)),          # b_o2
        ],
        out_specs=pl.BlockSpec((block_n, Hp), lambda d, i: (i, 0)),
        scratch_shapes=[
            pltpu.VMEM((2, Np, Hp), cdt),         # ping-pong messages across depth
            pltpu.VMEM((Np, Mp), jnp.float32),    # accumulated output_mess Linear-1
            pltpu.VMEM((block_n, Hp), jnp.float32),  # per-block neighbour sums
        ],
    )

    out_p = pl.pallas_call(
        kernel,
        out_shape=jax.ShapeDtypeStruct((Np, Hp), jnp.float32),
        grid_spec=grid_spec,
        compiler_params=pltpu.CompilerParams(
            dimension_semantics=("arbitrary", "arbitrary"),
            vmem_limit_bytes=vmem_limit),
        cost_estimate=pl.CostEstimate(flops=flops, transcendentals=0,
                                      bytes_accessed=bytes_accessed),
    )(xb_p, adj, w1h, w2, b2, wo1, bo1, wo2, bo2)

    return out_p[:N, :H]


def gcn_reference(fmess, mess_graph, params, depth):
    """Plain-JAX replica of the PyTorch GCN.forward (mask=None)."""
    H = params["Wg2_w"].shape[0]
    N = mess_graph.shape[0]
    messages = jnp.zeros((N, H), jnp.float32)
    layers = []
    for _ in range(depth):
        if mess_graph.shape[1] > 0:
            nei = messages[mess_graph].sum(axis=1)
        else:
            nei = jnp.zeros((N, H), jnp.float32)
        g_in = jnp.concatenate([fmess, nei], axis=1)
        h1 = jax.nn.relu(g_in @ params["Wg1_w"].T + params["Wg1_b"])
        tmp = h1 @ params["Wg2_w"].T + params["Wg2_b"]
        tmp = tmp.at[0, :].set(0.0)      # stored layer aliases `messages` in torch
        layers.append(tmp)
        messages = tmp
    cat = jnp.concatenate(layers, axis=1)
    o1 = jax.nn.relu(cat @ params["Wo1_w"].T + params["Wo1_b"])
    out = o1 @ params["Wo2_w"].T + params["Wo2_b"]
    return out.at[0, :].set(0.0)


if __name__ == "__main__":
    N, K = 128, 6                  # messages, neighbours per message
    D, H, DEPTH = 16, 32, 4        # input_size, hidden_size, depth
    M = (DEPTH // 2) * H

    key = jax.random.PRNGKey(0)
    k_f, k_g, k1, k2, k3, k4 = jax.random.split(key, 6)

    fmess = jax.random.normal(k_f, (N, D), dtype=jnp.float32)
    mess_graph = jax.random.randint(k_g, (N, K), 0, N, dtype=jnp.int32)

    def linear_init(k, out_f, in_f):
        kw, kb = jax.random.split(k)
        bound = 1.0 / (in_f ** 0.5)
        w = jax.random.uniform(kw, (out_f, in_f), jnp.float32, -bound, bound)
        b = jax.random.uniform(kb, (out_f,), jnp.float32, -bound, bound)
        return w, b

    wg1_w, wg1_b = linear_init(k1, H, D + H)
    wg2_w, wg2_b = linear_init(k2, H, H)
    wo1_w, wo1_b = linear_init(k3, M, DEPTH * H)
    wo2_w, wo2_b = linear_init(k4, H, M)
    params = {"Wg1_w": wg1_w, "Wg1_b": wg1_b, "Wg2_w": wg2_w, "Wg2_b": wg2_b,
              "Wo1_w": wo1_w, "Wo1_b": wo1_b, "Wo2_w": wo2_w, "Wo2_b": wo2_b}

    ref = gcn_reference(fmess, mess_graph, params, DEPTH)

    # f32 path, multi-row-block grid: exact match to the PyTorch/JAX reference
    out = jax.block_until_ready(
        gcn_forward(fmess, mess_graph, params, DEPTH, block_n=64))
    assert out.shape == (N, H) and out.dtype == jnp.float32
    assert jnp.allclose(out, ref, atol=1e-4, rtol=1e-4), "f32 kernel mismatch"

    # bf16 MXU operands (f32 accumulation), single row block -- looser tolerance
    out_bf16 = jax.block_until_ready(
        gcn_forward(fmess, mess_graph, params, DEPTH, block_n=128,
                    compute_dtype=jnp.bfloat16))
    assert jnp.allclose(out_bf16, ref, atol=7.5e-2, rtol=5e-2), "bf16 kernel mismatch"

    print("KERNEL_OK")
</pallas_src>

<mosaic_0001>
module attributes {stable_mosaic.version = 11 : i64} {
  func.func @gcn_kernel(%arg0: i32, %arg1: i32, %arg2: memref<64x128xf32, #tpu.memory_space<vmem>>, %arg3: memref<64x128xf32, #tpu.memory_space<vmem>>, %arg4: memref<128x128xf32, #tpu.memory_space<vmem>>, %arg5: memref<128x128xf32, #tpu.memory_space<vmem>>, %arg6: memref<1x128xf32, #tpu.memory_space<vmem>>, %arg7: memref<128x128xf32, #tpu.memory_space<vmem>>, %arg8: memref<1x128xf32, #tpu.memory_space<vmem>>, %arg9: memref<128x128xf32, #tpu.memory_space<vmem>>, %arg10: memref<1x128xf32, #tpu.memory_space<vmem>>, %arg11: memref<64x128xf32, #tpu.memory_space<vmem>>, %arg12: memref<2x128x128xf32, #tpu.memory_space<vmem>>, %arg13: memref<128x128xf32, #tpu.memory_space<vmem>>, %arg14: memref<64x128xf32, #tpu.memory_space<vmem>>) attributes {dimension_semantics = [#tpu.dimension_semantics<arbitrary>, #tpu.dimension_semantics<arbitrary>], iteration_bounds = array<i64: 4, 2>, scalar_prefetch = 0 : i64, scratch_operands = 3 : i64, tpu.core_type = #tpu.core_type<tc>, window_params = [{transform_indices = @transform_0, window_bounds = array<i64: 64, 128>}, {transform_indices = @transform_1, window_bounds = array<i64: 64, 128>}, {pipeline_mode = #tpu.pipeline_mode<synchronous>, transform_indices = @transform_2, window_bounds = array<i64: 128, 128>}, {pipeline_mode = #tpu.pipeline_mode<synchronous>, transform_indices = @transform_3, window_bounds = array<i64: 128, 128>}, {pipeline_mode = #tpu.pipeline_mode<synchronous>, transform_indices = @transform_4, window_bounds = array<i64: 1, 128>}, {transform_indices = @transform_5, window_bounds = array<i64: 128, 128>}, {pipeline_mode = #tpu.pipeline_mode<synchronous>, transform_indices = @transform_6, window_bounds = array<i64: 1, 128>}, {pipeline_mode = #tpu.pipeline_mode<synchronous>, transform_indices = @transform_7, window_bounds = array<i64: 128, 128>}, {pipeline_mode = #tpu.pipeline_mode<synchronous>, transform_indices = @transform_8, window_bounds = array<i64: 1, 128>}, {transform_indices = @transform_9, window_bounds = array<i64: 64, 128>}]} {
    %c2_i32 = arith.constant 2 : i32
    %c0_i32 = arith.constant 0 : i32
    %0 = arith.cmpi eq, %c2_i32, %c0_i32 : i32
    %c1_i32 = arith.constant 1 : i32
    %1 = arith.select %0, %c1_i32, %c2_i32 : i32
    %2 = arith.remsi %arg0, %1 : i32
    %c0_i32_0 = arith.constant 0 : i32
    %3 = arith.cmpi ne, %2, %c0_i32_0 : i32
    %c0_i32_1 = arith.constant 0 : i32
    %4 = arith.cmpi slt, %2, %c0_i32_1 : i32
    %c0_i32_2 = arith.constant 0 : i32
    %5 = arith.cmpi slt, %1, %c0_i32_2 : i32
    %6 = arith.xori %4, %5 : i1
    %7 = arith.andi %6, %3 : i1
    %8 = arith.addi %2, %1 : i32
    %9 = arith.select %7, %8, %2 : i32
    %c1_i32_3 = arith.constant 1 : i32
    %10 = arith.subi %c1_i32_3, %9 : i32
    %c64_i32 = arith.constant 64 : i32
    %11 = arith.muli %arg1, %c64_i32 : i32
    %12 = tpu.assume_multiple %11, 64 : i32
    %13 = tpu.iota {dimensions = array<i32: 0>} : vector<64x1xi32>
    %14 = vector.broadcast %12 : i32 to vector<64x1xi32>
    %15 = arith.addi %14, %13 : vector<64x1xi32>
    %c0_i32_4 = arith.constant 0 : i32
    %16 = vector.broadcast %c0_i32_4 : i32 to vector<64x1xi32>
    %17 = arith.cmpi ne, %15, %16 : vector<64x1xi32>
    %18 = arith.extui %17 : vector<64x1xi1> to vector<64x1xi32>
    %19 = arith.sitofp %18 : vector<64x1xi32> to vector<64x1xf32>
    %c0_i32_5 = arith.constant 0 : i32
    %20 = arith.cmpi eq, %arg0, %c0_i32_5 : i32
    %21 = arith.extui %20 : i1 to i32
    %c0_i32_6 = arith.constant 0 : i32
    %22 = arith.cmpi ne, %21, %c0_i32_6 : i32
    scf.if %22 {
      %cst_29 = arith.constant 0.000000e+00 : f32
      %56 = vector.broadcast %cst_29 : f32 to vector<64x128xf32>
      %c0_30 = arith.constant 0 : index
      %c0_31 = arith.constant 0 : index
      %57 = vector.load %arg14[%c0_30, %c0_31] : memref<64x128xf32, #tpu.memory_space<vmem>>, vector<64x128xf32>
      tpu.vector_store %arg14[%c0_30, %c0_31], %56 {strides = array<i32>} : memref<64x128xf32, #tpu.memory_space<vmem>>, vector<64x128xf32>,
    } else {
    }
    %c0_i32_7 = arith.constant 0 : i32
    %23 = arith.cmpi sgt, %arg0, %c0_i32_7 : i32
    %24 = arith.extui %23 : i1 to i32
    %c0_i32_8 = arith.constant 0 : i32
    %25 = arith.cmpi ne, %24, %c0_i32_8 : i32
    scf.if %25 {
      %c0_29 = arith.constant 0 : index
      %c0_30 = arith.constant 0 : index
      %56 = vector.load %arg3[%c0_29, %c0_30] : memref<64x128xf32, #tpu.memory_space<vmem>>, vector<64x128xf32>
      %57 = arith.index_cast %10 : i32 to index
      %c0_31 = arith.constant 0 : index
      %c0_32 = arith.constant 0 : index
      %58 = vector.load %arg12[%57, %c0_31, %c0_32] : memref<2x128x128xf32, #tpu.memory_space<vmem>>, vector<1x128x128xf32>
      %59 = vector.shape_cast %58 : vector<1x128x128xf32> to vector<128x128xf32>
      %cst_33 = arith.constant dense<0.000000e+00> : vector<64x128xf32>
      %60 = tpu.matmul %56, %59, %cst_33 {dimension_numbers = #tpu.dot_dimension_numbers<[1], [0], [0], [1], [0, 0, 1, 1], [], []>} : vector<64x128xf32>, vector<128x128xf32>, vector<64x128xf32> -> vector<64x128xf32>
      %c0_34 = arith.constant 0 : index
      %c0_35 = arith.constant 0 : index
      %61 = vector.load %arg14[%c0_34, %c0_35] : memref<64x128xf32, #tpu.memory_space<vmem>>, vector<64x128xf32>
      tpu.vector_store %arg14[%c0_34, %c0_35], %60 {strides = array<i32>} : memref<64x128xf32, #tpu.memory_space<vmem>>, vector<64x128xf32>,
    } else {
    }
    %c0 = arith.constant 0 : index
    %c0_9 = arith.constant 0 : index
    %26 = vector.load %arg2[%c0, %c0_9] : memref<64x128xf32, #tpu.memory_space<vmem>>, vector<64x128xf32>
    %c0_10 = arith.constant 0 : index
    %c0_11 = arith.constant 0 : index
    %27 = vector.load %arg14[%c0_10, %c0_11] : memref<64x128xf32, #tpu.memory_space<vmem>>, vector<64x128xf32>
    %c0_12 = arith.constant 0 : index
    %c0_13 = arith.constant 0 : index
    %28 = vector.load %arg4[%c0_12, %c0_13] : memref<128x128xf32, #tpu.memory_space<vmem>>, vector<128x128xf32>
    %cst = arith.constant dense<0.000000e+00> : vector<64x128xf32>
    %29 = tpu.matmul %27, %28, %cst {dimension_numbers = #tpu.dot_dimension_numbers<[1], [0], [0], [1], [0, 0, 1, 1], [], []>} : vector<64x128xf32>, vector<128x128xf32>, vector<64x128xf32> -> vector<64x128xf32>
    %30 = arith.addf %26, %29 : vector<64x128xf32>
    %cst_14 = arith.constant 0.000000e+00 : f32
    %31 = vector.broadcast %cst_14 : f32 to vector<64x128xf32>
    %32 = arith.maximumf %30, %31 : vector<64x128xf32>
    %c0_15 = arith.constant 0 : index
    %c0_16 = arith.constant 0 : index
    %33 = vector.load %arg5[%c0_15, %c0_16] : memref<128x128xf32, #tpu.memory_space<vmem>>, vector<128x128xf32>
    %cst_17 = arith.constant dense<0.000000e+00> : vector<64x128xf32>
    %34 = tpu.matmul %32, %33, %cst_17 {dimension_numbers = #tpu.dot_dimension_numbers<[1], [0], [0], [1], [0, 0, 1, 1], [], []>} : vector<64x128xf32>, vector<128x128xf32>, vector<64x128xf32> -> vector<64x128xf32>
    %c0_18 = arith.constant 0 : index
    %c0_19 = arith.constant 0 : index
    %35 = vector.load %arg6[%c0_18, %c0_19] : memref<1x128xf32, #tpu.memory_space<vmem>>, vector<1x128xf32>
    %36 = vector.broadcast %35 : vector<1x128xf32> to vector<64x128xf32>
    %37 = arith.addf %34, %36 : vector<64x128xf32>
    %38 = vector.broadcast %19 : vector<64x1xf32> to vector<64x128xf32>
    %39 = arith.mulf %37, %38 : vector<64x128xf32>
    %40 = arith.index_cast %9 : i32 to index
    %41 = arith.index_cast %12 : i32 to index
    %c0_20 = arith.constant 0 : index
    %42 = vector.load %arg12[%40, %41, %c0_20] : memref<2x128x128xf32, #tpu.memory_space<vmem>>, vector<1x64x128xf32>
    %43 = vector.shape_cast %42 : vector<1x64x128xf32> to vector<64x128xf32>
    %44 = vector.shape_cast %39 : vector<64x128xf32> to vector<1x64x128xf32>
    tpu.vector_store %arg12[%40, %41, %c0_20], %44 {strides = array<i32>} : memref<2x128x128xf32, #tpu.memory_space<vmem>>, vector<1x64x128xf32>,
    %c0_21 = arith.constant 0 : index
    %c0_22 = arith.constant 0 : index
    %45 = vector.load %arg7[%c0_21, %c0_22] : memref<128x128xf32, #tpu.memory_space<vmem>>, vector<128x128xf32>
    %cst_23 = arith.constant dense<0.000000e+00> : vector<64x128xf32>
    %46 = tpu.matmul %39, %45, %cst_23 {dimension_numbers = #tpu.dot_dimension_numbers<[1], [0], [0], [1], [0, 0, 1, 1], [], []>} : vector<64x128xf32>, vector<128x128xf32>, vector<64x128xf32> -> vector<64x128xf32>
    %c0_i32_24 = arith.constant 0 : i32
    %47 = arith.cmpi eq, %arg0, %c0_i32_24 : i32
    %48 = arith.extui %47 : i1 to i32
    %c0_i32_25 = arith.constant 0 : i32
    %49 = arith.cmpi ne, %48, %c0_i32_25 : i32
    scf.if %49 {
      %56 = arith.index_cast %12 : i32 to index
      %c0_29 = arith.constant 0 : index
      %57 = vector.load %arg13[%56, %c0_29] : memref<128x128xf32, #tpu.memory_space<vmem>>, vector<64x128xf32>
      tpu.vector_store %arg13[%56, %c0_29], %46 {strides = array<i32>} : memref<128x128xf32, #tpu.memory_space<vmem>>, vector<64x128xf32>,
    } else {
    }
    %c0_i32_26 = arith.constant 0 : i32
    %50 = arith.cmpi sgt, %arg0, %c0_i32_26 : i32
    %51 = arith.extui %50 : i1 to i32
    %c0_i32_27 = arith.constant 0 : i32
    %52 = arith.cmpi ne, %51, %c0_i32_27 : i32
    scf.if %52 {
      %56 = arith.index_cast %12 : i32 to index
      %c0_29 = arith.constant 0 : index
      %57 = vector.load %arg13[%56, %c0_29] : memref<128x128xf32, #tpu.memory_space<vmem>>, vector<64x128xf32>
      %58 = arith.addf %57, %46 : vector<64x128xf32>
      %59 = arith.index_cast %12 : i32 to index
      %c0_30 = arith.constant 0 : index
      %60 = vector.load %arg13[%59, %c0_30] : memref<128x128xf32, #tpu.memory_space<vmem>>, vector<64x128xf32>
      tpu.vector_store %arg13[%59, %c0_30], %58 {strides = array<i32>} : memref<128x128xf32, #tpu.memory_space<vmem>>, vector<64x128xf32>,
    } else {
    }
    %c3_i32 = arith.constant 3 : i32
    %53 = arith.cmpi eq, %arg0, %c3_i32 : i32
    %54 = arith.extui %53 : i1 to i32
    %c0_i32_28 = arith.constant 0 : i32
    %55 = arith.cmpi ne, %54, %c0_i32_28 : i32
    scf.if %55 {
      %56 = arith.index_cast %12 : i32 to index
      %c0_29 = arith.constant 0 : index
      %57 = vector.load %arg13[%56, %c0_29] : memref<128x128xf32, #tpu.memory_space<vmem>>, vector<64x128xf32>
      %c0_30 = arith.constant 0 : index
      %c0_31 = arith.constant 0 : index
      %58 = vector.load %arg8[%c0_30, %c0_31] : memref<1x128xf32, #tpu.memory_space<vmem>>, vector<1x128xf32>
      %59 = vector.broadcast %58 : vector<1x128xf32> to vector<64x128xf32>
      %60 = arith.addf %57, %59 : vector<64x128xf32>
      %cst_32 = arith.constant 0.000000e+00 : f32
      %61 = vector.broadcast %cst_32 : f32 to vector<64x128xf32>
      %62 = arith.maximumf %60, %61 : vector<64x128xf32>
      %c0_33 = arith.constant 0 : index
      %c0_34 = arith.constant 0 : index
      %63 = vector.load %arg9[%c0_33, %c0_34] : memref<128x128xf32, #tpu.memory_space<vmem>>, vector<128x128xf32>
      %cst_35 = arith.constant dense<0.000000e+00> : vector<64x128xf32>
      %64 = tpu.matmul %62, %63, %cst_35 {dimension_numbers = #tpu.dot_dimension_numbers<[1], [0], [0], [1], [0, 0, 1, 1], [], []>} : vector<64x128xf32>, vector<128x128xf32>, vector<64x128xf32> -> vector<64x128xf32>
      %c0_36 = arith.constant 0 : index
      %c0_37 = arith.constant 0 : index
      %65 = vector.load %arg10[%c0_36, %c0_37] : memref<1x128xf32, #tpu.memory_space<vmem>>, vector<1x128xf32>
      %66 = vector.broadcast %65 : vector<1x128xf32> to vector<64x128xf32>
      %67 = arith.addf %64, %66 : vector<64x128xf32>
      %68 = vector.broadcast %19 : vector<64x1xf32> to vector<64x128xf32>
      %69 = arith.mulf %67, %68 : vector<64x128xf32>
      %c0_38 = arith.constant 0 : index
      %c0_39 = arith.constant 0 : index
      %70 = vector.load %arg11[%c0_38, %c0_39] : memref<64x128xf32, #tpu.memory_space<vmem>>, vector<64x128xf32>
      tpu.vector_store %arg11[%c0_38, %c0_39], %69 {strides = array<i32>} : memref<64x128xf32, #tpu.memory_space<vmem>>, vector<64x128xf32>,
    } else {
    }
    return
  }
  func.func @transform_0(%arg0: i32, %arg1: i32) -> (i32, i32) {
    %c0_i32 = arith.constant 0 : i32
    %c0_i32_0 = arith.constant 0 : i32
    return %arg1, %c0_i32 : i32, i32
  }
  func.func @transform_1(%arg0: i32, %arg1: i32) -> (i32, i32) {
    %c0_i32 = arith.constant 0 : i32
    %c0_i32_0 = arith.constant 0 : i32
    return %arg1, %c0_i32 : i32, i32
  }
  func.func @transform_2(%arg0: i32, %arg1: i32) -> (i32, i32) {
    %c0_i32 = arith.constant 0 : i32
    %c0_i32_0 = arith.constant 0 : i32
    %c0_i32_1 = arith.constant 0 : i32
    return %c0_i32, %c0_i32_0 : i32, i32
  }
  func.func @transform_3(%arg0: i32, %arg1: i32) -> (i32, i32) {
    %c0_i32 = arith.constant 0 : i32
    %c0_i32_0 = arith.constant 0 : i32
    %c0_i32_1 = arith.constant 0 : i32
    return %c0_i32, %c0_i32_0 : i32, i32
  }
  func.func @transform_4(%arg0: i32, %arg1: i32) -> (i32, i32) {
    %c0_i32 = arith.constant 0 : i32
    %c0_i32_0 = arith.constant 0 : i32
    %c0_i32_1 = arith.constant 0 : i32
    return %c0_i32, %c0_i32_0 : i32, i32
  }
  func.func @transform_5(%arg0: i32, %arg1: i32) -> (i32, i32) {
    %c0_i32 = arith.constant 0 : i32
    %c0_i32_0 = arith.constant 0 : i32
    return %arg0, %c0_i32 : i32, i32
  }
  func.func @transform_6(%arg0: i32, %arg1: i32) -> (i32, i32) {
    %c0_i32 = arith.constant 0 : i32
    %c0_i32_0 = arith.constant 0 : i32
    %c0_i32_1 = arith.constant 0 : i32
    return %c0_i32, %c0_i32_0 : i32, i32
  }
  func.func @transform_7(%arg0: i32, %arg1: i32) -> (i32, i32) {
    %c0_i32 = arith.constant 0 : i32
    %c0_i32_0 = arith.constant 0 : i32
    %c0_i32_1 = arith.constant 0 : i32
    return %c0_i32, %c0_i32_0 : i32, i32
  }
  func.func @transform_8(%arg0: i32, %arg1: i32) -> (i32, i32) {
    %c0_i32 = arith.constant 0 : i32
    %c0_i32_0 = arith.constant 0 : i32
    %c0_i32_1 = arith.constant 0 : i32
    return %c0_i32, %c0_i32_0 : i32, i32
  }
  func.func @transform_9(%arg0: i32, %arg1: i32) -> (i32, i32) {
    %c0_i32 = arith.constant 0 : i32
    %c0_i32_0 = arith.constant 0 : i32
    return %arg1, %c0_i32 : i32, i32
  }
}

</mosaic_0001>

<llo_original>
// kernel: tpu_custom_call.1
$region0: #{tpu_custom_call.1}
  #allocation0 [shape = 'u32[]', space=smem, size = 0x4, offset = 0x4, fixed_abs, tag = 'smem constant byte address 0x4 - core index']
  #allocation1 [shape = 'u32[144,128]{1,0:T(1,128)}', space=vmem, size = 0x12000, scoped, tag = 'internal scratch']
  #allocation2 [shape = 'f32[2,128,128]{2,1,0:T(8,128)}', space=vmem, size = 0x20000, scoped, tag = 'scratch operand']
  #allocation3 [shape = 'f32[128,128]{1,0:T(8,128)}', space=vmem, size = 0x10000, scoped, tag = 'scratch operand']
  #allocation4 [shape = 'f32[64,128]{1,0:T(8,128)}', space=vmem, size = 0x8000, scoped, tag = 'scratch operand']
  %s0 = inlined_call_operand.hbm [shape: f32[128,128], index: 0, kind: input, shape index: {}]
  %s1 = inlined_call_operand.hbm [shape: f32[128,128], index: 1, kind: input, shape index: {}]
  %s2 = inlined_call_operand.hbm [shape: f32[128,128], index: 2, kind: input, shape index: {}]
  %s3 = inlined_call_operand.hbm [shape: f32[128,128], index: 3, kind: input, shape index: {}]
  %s4 = inlined_call_operand.vmem [shape: f32[1,128], index: 4, kind: input, shape index: {}]
  %s5 = inlined_call_operand.hbm [shape: f32[512,128], index: 5, kind: input, shape index: {}]
  %s6 = inlined_call_operand.vmem [shape: f32[1,128], index: 6, kind: input, shape index: {}]
  %s7 = inlined_call_operand.hbm [shape: f32[128,128], index: 7, kind: input, shape index: {}]
  %s8 = inlined_call_operand.vmem [shape: f32[1,128], index: 8, kind: input, shape index: {}]
  %s9 = inlined_call_operand.hbm [shape: f32[128,128], index: 9, kind: output, shape index: {}]
  %s10 = sld [smem:[#allocation0]]
  $region113: #{tpu_custom_call.1} parent=0
    _
  %s12 = ssub.s32 1, %s10
  %s13 = scalar_select 0, %s12, %s10
  $region1: #{tpu_custom_call.1} parent=0
    #allocation5 [shape = 'u8[65536]{0}', space=vmem, size = 0x10000, scoped, tag = 'input window, operand 0']
    #allocation6 [shape = 's32[2]{0}', space=sflag, size = 0x8, scoped, tag = 'scoped memory for tpu_custom_call.1']
    #allocation7 [shape = 's32[2]{0}', space=sflag, size = 0x8, scoped, tag = 'scoped memory for tpu_custom_call.1']
    #allocation8 [shape = 'u8[65536]{0}', space=vmem, size = 0x10000, scoped, tag = 'input window, operand 1']
    #allocation9 [shape = 's32[2]{0}', space=sflag, size = 0x8, scoped, tag = 'scoped memory for tpu_custom_call.1']
    #allocation10 [shape = 'u8[65536]{0}', space=vmem, size = 0x10000, scoped, tag = 'input window, operand 2, single buffered']
    #allocation11 [shape = 'u8[65536]{0}', space=vmem, size = 0x10000, scoped, tag = 'input window, operand 3, single buffered']
    #allocation12 [shape = 's32[1]{0}', space=sflag, size = 0x4, scoped, tag = 'scoped memory for tpu_custom_call.1']
    #allocation13 [shape = 'u8[131072]{0}', space=vmem, size = 0x20000, scoped, tag = 'input window, operand 5']
    #allocation14 [shape = 'u8[65536]{0}', space=vmem, size = 0x10000, scoped, tag = 'input window, operand 7, single buffered']
    #allocation15 [shape = 'u8[65536]{0}', space=vmem, size = 0x10000, scoped, tag = 'output window, operand 0']
    %14 = vsyncpa [#allocation6], 0
    %s15 = scalar_lea.sflag [#allocation6], 1
    %16 = vsyncpa %s15, 0
    %17 = vsyncpa [#allocation9], 0
    %s18 = scalar_lea.sflag [#allocation9], 1
    %19 = vsyncpa %s18, 0
    %20 = vsyncpa [#allocation12], 0
    %21 = vsyncpa [#allocation7], 0
    %s22 = scalar_lea.sflag [#allocation7], 1
    %23 = vsyncpa %s22, 0
    loop: start=0, step=1, limit=10
    $region2: #{tpu_custom_call.1} parent=1 // loop_pre_header
      _
    $region3: #{tpu_custom_call.1} parent=1 // loop_header
      %s25 = sphi 0, %s29
      %p26 = scmp.ge.s32.totalorder %s25, 10
      %s32 = sphi 0, %s44
      %s33 = sphi 0, %s40
      %s34 = sphi 0, %s32
      %s35 = sphi 0, %s33
      %s36 = sphi 0, %s34
      %s37 = sphi 0, %s35
      %s47 = sphi 0, %s49
      %s50 = sphi 0, %s47
      %s51 = sphi 0, %s50
      %s67 = sphi 0, %s51
      %s73 = sphi 0, %s75
      %s76 = sphi 0, %s73
      %s77 = sphi 0, %s76
      %s93 = sphi 0, %s77
      %s97 = sphi 0, %s97
      %s99 = sphi 0, %s97
      %s100 = sphi 0, %s99
      %s114 = sphi 0, %s100
      %s118 = sphi 0, %s118
      %s120 = sphi 0, %s118
      %s121 = sphi 0, %s120
      %s135 = sphi 0, %s121
      %s139 = sphi 0, %s139
      %s141 = sphi 0, %s139
      %s142 = sphi 0, %s141
      %s156 = sphi 0, %s142
      %s162 = sphi 0, %s164
      %s165 = sphi 0, %s162
      %s166 = sphi 0, %s165
      %s182 = sphi 0, %s166
      %s186 = sphi 0, %s186
      %s188 = sphi 0, %s186
      %s189 = sphi 0, %s188
      %s203 = sphi 0, %s189
      %s207 = sphi 0, %s207
      %s209 = sphi 0, %s207
      %s210 = sphi 0, %s209
      %s224 = sphi 0, %s210
      %s228 = sphi 0, %s228
      %s230 = sphi 0, %s228
      %s231 = sphi 0, %s230
      %s245 = sphi 0, %s231
      %s251 = sphi 0, %s253
      %s254 = sphi 0, %s251
      %s255 = sphi 0, %s254
      %s271 = sphi 0, %s255
    $region4: #{tpu_custom_call.1} parent=1 // loop_header_branch
      %28 = sbr.rel (%p26) target = $region8
    $region5: #{tpu_custom_call.1} parent=1 // loop_body
      %s30 = ssub.s32 %s25, 1
      %s31 = ssub.s32 %s25, 2
      %s38 = sadd.s32 1, %s33
      %p39 = scmp.ge.s32.totalorder %s38, 2
      %s40 = scalar_select %p39, 0, %s38
      %s41 = sadd.s32 1, %s32
      %s42 = scalar_select %p39, %s41, %s32
      %p43 = scmp.ge.s32.totalorder %s42, 4
      %s44 = scalar_select %p43, 0, %s42
      %s45 = ssub.s32 %s33, %s40
      %p46 = scmp.eq.s32.totalorder %s45, 0
      %s48 = sadd.s32 %s47, 1
      %s49 = scalar_select %p46, %s47, %s48
      %p52 = pneg %p46
      %p53 = scmp.eq.s32.totalorder %s25, 7
      %p54 = por %p52, %p53
      %p55 = scmp.ne.s32.totalorder %s47, %s50
      %p56 = scmp.eq.s32.totalorder %s25, 0
      %p57 = por %p55, %p56
      %p58 = scmp.ne.s32.totalorder %s47, %s50
      %p59 = scmp.eq.s32.totalorder %s30, 7
      %p60 = por %p58, %p59
      %p61 = scmp.ne.s32.totalorder %s50, %s51
      %p62 = scmp.eq.s32.totalorder %s30, 0
      %p63 = por %p61, %p62
      %p64 = scmp.ne.s32.totalorder %s50, %s51
      %p65 = scmp.eq.s32.totalorder %s31, 7
      %p66 = por %p64, %p65
      %p68 = scmp.ne.s32.totalorder %s51, %s67
      %p69 = scmp.eq.s32.totalorder %s31, 0
      %p70 = por %p68, %p69
      %s71 = ssub.s32 %s33, %s40
      %p72 = scmp.eq.s32.totalorder %s71, 0
      %s74 = sadd.s32 %s73, 1
      %s75 = scalar_select %p72, %s73, %s74
      %p78 = pneg %p72
      %p79 = scmp.eq.s32.totalorder %s25, 7
      %p80 = por %p78, %p79
      %p81 = scmp.ne.s32.totalorder %s73, %s76
      %p82 = scmp.eq.s32.totalorder %s25, 0
      %p83 = por %p81, %p82
      %p84 = scmp.ne.s32.totalorder %s73, %s76
      %p85 = scmp.eq.s32.totalorder %s30, 7
      %p86 = por %p84, %p85
      %p87 = scmp.ne.s32.totalorder %s76, %s77
      %p88 = scmp.eq.s32.totalorder %s30, 0
      %p89 = por %p87, %p88
      %p90 = scmp.ne.s32.totalorder %s76, %s77
      %p91 = scmp.eq.s32.totalorder %s31, 7
      %p92 = por %p90, %p91
      %p94 = scmp.ne.s32.totalorder %s77, %s93
      %p95 = scmp.eq.s32.totalorder %s31, 0
      %p96 = por %p94, %p95
      %s98 = sadd.s32 %s97, 1
      %p101 = scmp.eq.s32.totalorder %s25, 7
      %p102 = scmp.ne.s32.totalorder %s97, %s99
      %p103 = scmp.eq.s32.totalorder %s25, 0
      %p104 = por %p102, %p103
      %p105 = scmp.ne.s32.totalorder %s97, %s99
      %p106 = scmp.eq.s32.totalorder %s30, 7
      %p107 = por %p105, %p106
      %p108 = scmp.ne.s32.totalorder %s99, %s100
      %p109 = scmp.eq.s32.totalorder %s30, 0
      %p110 = por %p108, %p109
      %p111 = scmp.ne.s32.totalorder %s99, %s100
      %p112 = scmp.eq.s32.totalorder %s31, 7
      %p113 = por %p111, %p112
      %p115 = scmp.ne.s32.totalorder %s100, %s114
      %p116 = scmp.eq.s32.totalorder %s31, 0
      %p117 = por %p115, %p116
      %s119 = sadd.s32 %s118, 1
      %p122 = scmp.eq.s32.totalorder %s25, 7
      %p123 = scmp.ne.s32.totalorder %s118, %s120
      %p124 = scmp.eq.s32.totalorder %s25, 0
      %p125 = por %p123, %p124
      %p126 = scmp.ne.s32.totalorder %s118, %s120
      %p127 = scmp.eq.s32.totalorder %s30, 7
      %p128 = por %p126, %p127
      %p129 = scmp.ne.s32.totalorder %s120, %s121
      %p130 = scmp.eq.s32.totalorder %s30, 0
      %p131 = por %p129, %p130
      %p132 = scmp.ne.s32.totalorder %s120, %s121
      %p133 = scmp.eq.s32.totalorder %s31, 7
      %p134 = por %p132, %p133
      %p136 = scmp.ne.s32.totalorder %s121, %s135
      %p137 = scmp.eq.s32.totalorder %s31, 0
      %p138 = por %p136, %p137
      %s140 = sadd.s32 %s139, 1
      %p143 = scmp.eq.s32.totalorder %s25, 7
      %p144 = scmp.ne.s32.totalorder %s139, %s141
      %p145 = scmp.eq.s32.totalorder %s25, 0
      %p146 = por %p144, %p145
      %p147 = scmp.ne.s32.totalorder %s139, %s141
      %p148 = scmp.eq.s32.totalorder %s30, 7
      %p149 = por %p147, %p148
      %p150 = scmp.ne.s32.totalorder %s141, %s142
      %p151 = scmp.eq.s32.totalorder %s30, 0
      %p152 = por %p150, %p151
      %p153 = scmp.ne.s32.totalorder %s141, %s142
      %p154 = scmp.eq.s32.totalorder %s31, 7
      %p155 = por %p153, %p154
      %p157 = scmp.ne.s32.totalorder %s142, %s156
      %p158 = scmp.eq.s32.totalorder %s31, 0
      %p159 = por %p157, %p158
      %s160 = ssub.s32 %s32, %s44
      %p161 = scmp.eq.s32.totalorder %s160, 0
      %s163 = sadd.s32 %s162, 1
      %s164 = scalar_select %p161, %s162, %s163
      %p167 = pneg %p161
      %p168 = scmp.eq.s32.totalorder %s25, 7
      %p169 = por %p167, %p168
      %p170 = scmp.ne.s32.totalorder %s162, %s165
      %p171 = scmp.eq.s32.totalorder %s25, 0
      %p172 = por %p170, %p171
      %p173 = scmp.ne.s32.totalorder %s162, %s165
      %p174 = scmp.eq.s32.totalorder %s30, 7
      %p175 = por %p173, %p174
      %p176 = scmp.ne.s32.totalorder %s165, %s166
      %p177 = scmp.eq.s32.totalorder %s30, 0
      %p178 = por %p176, %p177
      %p179 = scmp.ne.s32.totalorder %s165, %s166
      %p180 = scmp.eq.s32.totalorder %s31, 7
      %p181 = por %p179, %p180
      %p183 = scmp.ne.s32.totalorder %s166, %s182
      %p184 = scmp.eq.s32.totalorder %s31, 0
      %p185 = por %p183, %p184
      %s187 = sadd.s32 %s186, 1
      %p190 = scmp.eq.s32.totalorder %s25, 7
      %p191 = scmp.ne.s32.totalorder %s186, %s188
      %p192 = scmp.eq.s32.totalorder %s25, 0
      %p193 = por %p191, %p192
      %p194 = scmp.ne.s32.totalorder %s186, %s188
      %p195 = scmp.eq.s32.totalorder %s30, 7
      %p196 = por %p194, %p195
      %p197 = scmp.ne.s32.totalorder %s188, %s189
      %p198 = scmp.eq.s32.totalorder %s30, 0
      %p199 = por %p197, %p198
      %p200 = scmp.ne.s32.totalorder %s188, %s189
      %p201 = scmp.eq.s32.totalorder %s31, 7
      %p202 = por %p200, %p201
      %p204 = scmp.ne.s32.totalorder %s189, %s203
      %p205 = scmp.eq.s32.totalorder %s31, 0
      %p206 = por %p204, %p205
      %s208 = sadd.s32 %s207, 1
      %p211 = scmp.eq.s32.totalorder %s25, 7
      %p212 = scmp.ne.s32.totalorder %s207, %s209
      %p213 = scmp.eq.s32.totalorder %s25, 0
      %p214 = por %p212, %p213
      %p215 = scmp.ne.s32.totalorder %s207, %s209
      %p216 = scmp.eq.s32.totalorder %s30, 7
      %p217 = por %p215, %p216
      %p218 = scmp.ne.s32.totalorder %s209, %s210
      %p219 = scmp.eq.s32.totalorder %s30, 0
      %p220 = por %p218, %p219
      %p221 = scmp.ne.s32.totalorder %s209, %s210
      %p222 = scmp.eq.s32.totalorder %s31, 7
      %p223 = por %p221, %p222
      %p225 = scmp.ne.s32.totalorder %s210, %s224
      %p226 = scmp.eq.s32.totalorder %s31, 0
      %p227 = por %p225, %p226
      %s229 = sadd.s32 %s228, 1
      %p232 = scmp.eq.s32.totalorder %s25, 7
      %p233 = scmp.ne.s32.totalorder %s228, %s230
      %p234 = scmp.eq.s32.totalorder %s25, 0
      %p235 = por %p233, %p234
      %p236 = scmp.ne.s32.totalorder %s228, %s230
      %p237 = scmp.eq.s32.totalorder %s30, 7
      %p238 = por %p236, %p237
      %p239 = scmp.ne.s32.totalorder %s230, %s231
      %p240 = scmp.eq.s32.totalorder %s30, 0
      %p241 = por %p239, %p240
      %p242 = scmp.ne.s32.totalorder %s230, %s231
      %p243 = scmp.eq.s32.totalorder %s31, 7
      %p244 = por %p242, %p243
      %p246 = scmp.ne.s32.totalorder %s231, %s245
      %p247 = scmp.eq.s32.totalorder %s31, 0
      %p248 = por %p246, %p247
      %s249 = ssub.s32 %s33, %s40
      %p250 = scmp.eq.s32.totalorder %s249, 0
      %s252 = sadd.s32 %s251, 1
      %s253 = scalar_select %p250, %s251, %s252
      %p256 = pneg %p250
      %p257 = scmp.eq.s32.totalorder %s25, 7
      %p258 = por %p256, %p257
      %p259 = scmp.ne.s32.totalorder %s251, %s254
      %p260 = scmp.eq.s32.totalorder %s25, 0
      %p261 = por %p259, %p260
      %p262 = scmp.ne.s32.totalorder %s251, %s254
      %p263 = scmp.eq.s32.totalorder %s30, 7
      %p264 = por %p262, %p263
      %p265 = scmp.ne.s32.totalorder %s254, %s255
      %p266 = scmp.eq.s32.totalorder %s30, 0
      %p267 = por %p265, %p266
      %p268 = scmp.ne.s32.totalorder %s254, %s255
      %p269 = scmp.eq.s32.totalorder %s31, 7
      %p270 = por %p268, %p269
      %p272 = scmp.ne.s32.totalorder %s255, %s271
      %p273 = scmp.eq.s32.totalorder %s31, 0
      %p274 = por %p272, %p273
      %p275 = scmp.le.s32.totalorder 1, %s25
      %p276 = scmp.lt.s32.totalorder %s25, 9
      %p277 = pnand %p275, %p276
      %p278 = pneg %p277
      // Predicated region
      $region9: #{tpu_custom_call.1} parent=5 // pred_check
        _
      $region10: #{tpu_custom_call.1} parent=5 // pred_check_branch
        %280 = sbr.rel (%p277) target = $region12
      $region11: #{tpu_custom_call.1} parent=5 // pred_region
        %s281 = ssub.s32 %s25, 1
        // Predicated region
        $region13: #{tpu_custom_call.1} parent=11 // pred_check
          %p282 = pneg %p110
        $region14: #{tpu_custom_call.1} parent=11 // pred_check_branch
          %284 = sbr.rel (%p282) target = $region16
        $region15: #{tpu_custom_call.1} parent=11 // pred_region
          %s286 = ssub.s32 2048, 2048
          %287 = vsyncadd [#allocation9], %s286
          %s288 = sshll.u32 [#allocation10], 4
          %s289 = int_to_ptr.vmem [resolvable:$true] %s288
          %294 = dma.hbm_to_vmem [thread:$0]  %s2, 2048, %s289, [#allocation9], 128, 128, 8
        $region16: #{tpu_custom_call.1} parent=11 // pred_fallthru
          _
        // Predicated region
        $region17: #{tpu_custom_call.1} parent=11 // pred_check
          %p295 = pneg %p131
        $region18: #{tpu_custom_call.1} parent=11 // pred_check_branch
          %297 = sbr.rel (%p295) target = $region20
        $region19: #{tpu_custom_call.1} parent=11 // pred_region
          %s299 = ssub.s32 2048, 2048
          %300 = vsyncadd [#allocation12], %s299
          %s301 = sshll.u32 [#allocation11], 4
          %s302 = int_to_ptr.vmem [resolvable:$true] %s301
          %307 = dma.hbm_to_vmem [thread:$0]  %s3, 2048, %s302, [#allocation12], 128, 128, 8
        $region20: #{tpu_custom_call.1} parent=11 // pred_fallthru
          _
        // Predicated region
        $region21: #{tpu_custom_call.1} parent=11 // pred_check
          %p308 = pneg %p152
        $region22: #{tpu_custom_call.1} parent=11 // pred_check_branch
          %310 = sbr.rel (%p308) target = $region24
        $region23: #{tpu_custom_call.1} parent=11 // pred_region
          _
        $region24: #{tpu_custom_call.1} parent=11 // pred_fallthru
          _
        // Predicated region
        $region25: #{tpu_custom_call.1} parent=11 // pred_check
          %p311 = pneg %p199
        $region26: #{tpu_custom_call.1} parent=11 // pred_check_branch
          %313 = sbr.rel (%p311) target = $region28
        $region27: #{tpu_custom_call.1} parent=11 // pred_region
          _
        $region28: #{tpu_custom_call.1} parent=11 // pred_fallthru
          _
        // Predicated region
        $region29: #{tpu_custom_call.1} parent=11 // pred_check
          %p314 = pneg %p220
        $region30: #{tpu_custom_call.1} parent=11 // pred_check_branch
          %316 = sbr.rel (%p314) target = $region32
        $region31: #{tpu_custom_call.1} parent=11 // pred_region
          %s318 = ssub.s32 2048, 2048
          %319 = vsyncadd [#allocation9], %s318
          %s320 = sshll.u32 [#allocation14], 4
          %s321 = int_to_ptr.vmem [resolvable:$true] %s320
          %326 = dma.hbm_to_vmem [thread:$0]  %s7, 2048, %s321, [#allocation9], 128, 128, 8
        $region32: #{tpu_custom_call.1} parent=11 // pred_fallthru
          _
        // Predicated region
        $region33: #{tpu_custom_call.1} parent=11 // pred_check
          %p327 = pneg %p241
        $region34: #{tpu_custom_call.1} parent=11 // pred_check_branch
          %329 = sbr.rel (%p327) target = $region36
        $region35: #{tpu_custom_call.1} parent=11 // pred_region
          _
        $region36: #{tpu_custom_call.1} parent=11 // pred_fallthru
          _
      $region12: #{tpu_custom_call.1} parent=5 // pred_fallthru
        _
      %p330 = scmp.lt.s32.totalorder %s25, 8
      // Predicated region
      $region37: #{tpu_custom_call.1} parent=5 // pred_check
        %p331 = pneg %p330
      $region38: #{tpu_custom_call.1} parent=5 // pred_check_branch
        %333 = sbr.rel (%p331) target = $region40
      $region39: #{tpu_custom_call.1} parent=5 // pred_region
        // Predicated region
        $region41: #{tpu_custom_call.1} parent=39 // pred_check
          %p334 = pneg %p57
        $region42: #{tpu_custom_call.1} parent=39 // pred_check_branch
          %336 = sbr.rel (%p334) target = $region44
        $region43: #{tpu_custom_call.1} parent=39 // pred_region
          %s337 = sand.u32 %s25, 1
          %s338 = scalar_lea.sflag [#allocation6], %s337
          %s339 = sand.u32 %s47, 1
          %s340 = smul.addr %s339, 64
          %s341 = scalar_lea.vmem [#allocation5], %s340
          %s342 = smul.u32 8, %s33
          %s344 = ssub.s32 1024, 1024
          %345 = vsyncadd %s338, %s344
          %s346 = smul.addr %s342, 128
          %s347 = scalar_lea.hbm %s0, %s346
          %s348 = sshll.u32 %s341, 4
          %s349 = int_to_ptr.vmem [resolvable:$true] %s348
          %354 = dma.hbm_to_vmem [thread:$0]  %s347, 1024, %s349, %s338, 128, 128, 8
        $region44: #{tpu_custom_call.1} parent=39 // pred_fallthru
          _
        // Predicated region
        $region45: #{tpu_custom_call.1} parent=39 // pred_check
          %p355 = pneg %p83
        $region46: #{tpu_custom_call.1} parent=39 // pred_check_branch
          %357 = sbr.rel (%p355) target = $region48
        $region47: #{tpu_custom_call.1} parent=39 // pred_region
          %s358 = sand.u32 %s25, 1
          %s359 = scalar_lea.sflag [#allocation9], %s358
          %s360 = sand.u32 %s73, 1
          %s361 = smul.addr %s360, 64
          %s362 = scalar_lea.vmem [#allocation8], %s361
          %s363 = smul.u32 8, %s33
          %s365 = ssub.s32 1024, 1024
          %366 = vsyncadd %s359, %s365
          %s367 = smul.addr %s363, 128
          %s368 = scalar_lea.hbm %s1, %s367
          %s369 = sshll.u32 %s362, 4
          %s370 = int_to_ptr.vmem [resolvable:$true] %s369
          %375 = dma.hbm_to_vmem [thread:$0]  %s368, 1024, %s370, %s359, 128, 128, 8
        $region48: #{tpu_custom_call.1} parent=39 // pred_fallthru
          _
        // Predicated region
        $region49: #{tpu_custom_call.1} parent=39 // pred_check
          %p376 = pneg %p172
        $region50: #{tpu_custom_call.1} parent=39 // pred_check_branch
          %378 = sbr.rel (%p376) target = $region52
        $region51: #{tpu_custom_call.1} parent=39 // pred_region
          %s379 = sand.u32 %s25, 1
          %s380 = scalar_lea.sflag [#allocation6], %s379
          %s381 = sand.u32 %s162, 1
          %s382 = smul.addr %s381, 128
          %s383 = scalar_lea.vmem [#allocation13], %s382
          %s384 = smul.u32 16, %s32
          %s386 = ssub.s32 2048, 2048
          %387 = vsyncadd %s380, %s386
          %s388 = smul.addr %s384, 128
          %s389 = scalar_lea.hbm %s5, %s388
          %s390 = sshll.u32 %s383, 4
          %s391 = int_to_ptr.vmem [resolvable:$true] %s390
          %396 = dma.hbm_to_vmem [thread:$0]  %s389, 2048, %s391, %s380, 128, 128, 8
        $region52: #{tpu_custom_call.1} parent=39 // pred_fallthru
          _
      $region40: #{tpu_custom_call.1} parent=5 // pred_fallthru
        _
      %p397 = scmp.le.s32.totalorder 1, %s25
      %p398 = scmp.lt.s32.totalorder %s25, 9
      %p399 = pnand %p397, %p398
      %p400 = pneg %p399
      // Predicated region
      $region53: #{tpu_custom_call.1} parent=5 // pred_check
        _
      $region54: #{tpu_custom_call.1} parent=5 // pred_check_branch
        %402 = sbr.rel (%p399) target = $region56
      $region55: #{tpu_custom_call.1} parent=5 // pred_region
        %s403 = ssub.s32 %s25, 1
        %s404 = sand.u32 %s30, 1
        %s405 = scalar_lea.sflag [#allocation6], %s404
        %s406 = sand.u32 %s50, 1
        %s407 = smul.addr %s406, 64
        %s408 = scalar_lea.vmem [#allocation5], %s407
        // Predicated region
        $region57: #{tpu_custom_call.1} parent=55 // pred_check
          %p409 = pneg %p63
        $region58: #{tpu_custom_call.1} parent=55 // pred_check_branch
          %411 = sbr.rel (%p409) target = $region60
        $region59: #{tpu_custom_call.1} parent=55 // pred_region
          %412 = dma.done %s405, 1024
        $region60: #{tpu_custom_call.1} parent=55 // pred_fallthru
          _
        %s413 = sand.u32 %s30, 1
        %s414 = scalar_lea.sflag [#allocation9], %s413
        %s415 = sand.u32 %s76, 1
        %s416 = smul.addr %s415, 64
        %s417 = scalar_lea.vmem [#allocation8], %s416
        // Predicated region
        $region61: #{tpu_custom_call.1} parent=55 // pred_check
          %p418 = pneg %p89
        $region62: #{tpu_custom_call.1} parent=55 // pred_check_branch
          %420 = sbr.rel (%p418) target = $region64
        $region63: #{tpu_custom_call.1} parent=55 // pred_region
          %421 = dma.done %s414, 1024
        $region64: #{tpu_custom_call.1} parent=55 // pred_fallthru
          _
        // Predicated region
        $region65: #{tpu_custom_call.1} parent=55 // pred_check
          %p422 = pneg %p110
        $region66: #{tpu_custom_call.1} parent=55 // pred_check_branch
          %424 = sbr.rel (%p422) target = $region68
        $region67: #{tpu_custom_call.1} parent=55 // pred_region
          %425 = dma.done [#allocation9], 2048
        $region68: #{tpu_custom_call.1} parent=55 // pred_fallthru
          _
        // Predicated region
        $region69: #{tpu_custom_call.1} parent=55 // pred_check
          %p426 = pneg %p131
        $region70: #{tpu_custom_call.1} parent=55 // pred_check_branch
          %428 = sbr.rel (%p426) target = $region72
        $region71: #{tpu_custom_call.1} parent=55 // pred_region
          %429 = dma.done [#allocation12], 2048
        $region72: #{tpu_custom_call.1} parent=55 // pred_fallthru
          _
        %s430 = sand.u32 %s30, 1
        %s431 = scalar_lea.sflag [#allocation6], %s430
        %s432 = sand.u32 %s165, 1
        %s433 = smul.addr %s432, 128
        %s434 = scalar_lea.vmem [#allocation13], %s433
        // Predicated region
        $region73: #{tpu_custom_call.1} parent=55 // pred_check
          %p435 = pneg %p178
        $region74: #{tpu_custom_call.1} parent=55 // pred_check_branch
          %437 = sbr.rel (%p435) target = $region76
        $region75: #{tpu_custom_call.1} parent=55 // pred_region
          %438 = dma.done %s431, 2048
        $region76: #{tpu_custom_call.1} parent=55 // pred_fallthru
          _
        // Predicated region
        $region77: #{tpu_custom_call.1} parent=55 // pred_check
          %p439 = pneg %p220
        $region78: #{tpu_custom_call.1} parent=55 // pred_check_branch
          %441 = sbr.rel (%p439) target = $region80
        $region79: #{tpu_custom_call.1} parent=55 // pred_region
          %442 = dma.done [#allocation9], 2048
        $region80: #{tpu_custom_call.1} parent=55 // pred_fallthru
          _
        %s443 = sand.u32 %s30, 1
        %s444 = scalar_lea.sflag [#allocation6], %s443
        %s445 = sand.u32 %s50, 1
        %s446 = smul.addr %s445, 64
        %s447 = scalar_lea.vmem [#allocation5], %s446
        %p448 = pneg %p63
        %p449 = pneg %p60
        %s450 = sand.u32 %s30, 1
        %s451 = scalar_lea.sflag [#allocation9], %s450
        %s452 = sand.u32 %s76, 1
        %s453 = smul.addr %s452, 64
        %s454 = scalar_lea.vmem [#allocation8], %s453
        %p455 = pneg %p89
        %p456 = pneg %p86
        %p457 = pneg %p110
        %p458 = pneg %p107
        %p459 = pneg %p131
        %p460 = pneg %p128
        %p461 = pneg %p152
        %p462 = pneg %p149
        %s463 = sand.u32 %s30, 1
        %s464 = scalar_lea.sflag [#allocation6], %s463
        %s465 = sand.u32 %s165, 1
        %s466 = smul.addr %s465, 128
        %s467 = scalar_lea.vmem [#allocation13], %s466
        %p468 = pneg %p178
        %p469 = pneg %p175
        %p470 = pneg %p199
        %p471 = pneg %p196
        %p472 = pneg %p220
        %p473 = pneg %p217
        %p474 = pneg %p241
        %p475 = pneg %p238
        %p476 = pneg %p267
        %p477 = pneg %p264
        %s478 = sand.u32 %s254, 1
        %s479 = scalar_lea.sflag [#allocation7], %s478
        %s480 = sand.u32 %s254, 1
        %s481 = smul.addr %s480, 64
        %s482 = scalar_lea.vmem [#allocation15], %s481
        %s483 = smul.u32 8, %s35
        %s484 = smul.u32 8, %s35
        %s485 = smul.u32 16, %s34
        %s486 = smul.u32 8, %s35
        %p487 = scmp.lt.s32.totalorder %s34, 0
        %s488 = ssub.s32 0, %s34
        %s489 = scalar_select %p487, %s488, %s34
        %s490 = sand.u32 %s489, 1
        %s491 = ssub.s32 0, %s490
        %s492 = scalar_select %p487, %s491, %s490
        %p493 = scmp.ne.s32.totalorder %s492, 0
        %p494 = scmp.lt.s32.totalorder %s492, 0
        %p495 = pnand %p494, %p493
        %p496 = pneg %p495
        %s497 = sadd.s32 %s492, 2
        %s498 = scalar_select %p496, %s497, %s492
        %s499 = ssub.s32 1, %s498
        %s500 = smul.u32 %s35, 64
        %v501 = vlaneseq
        %v502 = vshrl.u32 %v501, 7
        %v503 = vadd.s32 %v502, 8
        %v504 = vadd.s32 %v502, 16
        %v505 = vadd.s32 %v502, 24
        %v506 = vadd.s32 %v502, 32
        %v507 = vadd.s32 %v502, 40
        %v508 = vadd.s32 %v502, 48
        %v509 = vadd.s32 %v502, 56
        %v510 = vstv %s500
        %v511 = vadd.s32 %v510, %v502
        %v512 = vadd.s32 %v510, %v503
        %v513 = vadd.s32 %v510, %v504
        %v514 = vadd.s32 %v510, %v505
        %v515 = vadd.s32 %v510, %v506
        %v516 = vadd.s32 %v510, %v507
        %v517 = vadd.s32 %v510, %v508
        %v518 = vadd.s32 %v510, %v509
        %vm519 = vcmp.ne.s32.totalorder %v511, 0
        %vm520 = vcmp.ne.s32.totalorder %v512, 0
        %vm521 = vcmp.ne.s32.totalorder %v513, 0
        %vm522 = vcmp.ne.s32.totalorder %v514, 0
        %vm523 = vcmp.ne.s32.totalorder %v515, 0
        %vm524 = vcmp.ne.s32.totalorder %v516, 0
        %vm525 = vcmp.ne.s32.totalorder %v517, 0
        %vm526 = vcmp.ne.s32.totalorder %v518, 0
        %v527 = vsel %vm519, 1, 0
        %v528 = vsel %vm520, 1, 0
        %v529 = vsel %vm521, 1, 0
        %v530 = vsel %vm522, 1, 0
        %v531 = vsel %vm523, 1, 0
        %v532 = vsel %vm524, 1, 0
        %v533 = vsel %vm525, 1, 0
        %v534 = vsel %vm526, 1, 0
        %v535 = vcvt.s32.f32 %v527
        %v536 = vcvt.s32.f32 %v528
        %v537 = vcvt.s32.f32 %v529
        %v538 = vcvt.s32.f32 %v530
        %v539 = vcvt.s32.f32 %v531
        %v540 = vcvt.s32.f32 %v532
        %v541 = vcvt.s32.f32 %v533
        %v542 = vcvt.s32.f32 %v534
        %p543 = scmp.eq.s32.totalorder %s34, 0
        // Predicated region
        $region81: #{tpu_custom_call.1} parent=55 // pred_check
          %p544 = pneg %p543
        $region82: #{tpu_custom_call.1} parent=55 // pred_check_branch
          %546 = sbr.rel (%p544) target = $region84
        $region83: #{tpu_custom_call.1} parent=55 // pred_region
          %547 = vst [vmem:[#allocation4] sm:$0xff] 0.0
          %548 = vst [vmem:[#allocation4 + $0x8] sm:$0xff] 0.0
          %549 = vst [vmem:[#allocation4 + $0x10] sm:$0xff] 0.0
          %550 = vst [vmem:[#allocation4 + $0x18] sm:$0xff] 0.0
          %551 = vst [vmem:[#allocation4 + $0x20] sm:$0xff] 0.0
          %552 = vst [vmem:[#allocation4 + $0x28] sm:$0xff] 0.0
          %553 = vst [vmem:[#allocation4 + $0x30] sm:$0xff] 0.0
          %554 = vst [vmem:[#allocation4 + $0x38] sm:$0xff] 0.0
        $region84: #{tpu_custom_call.1} parent=55 // pred_fallthru
          _
        %p555 = scmp.gt.s32.totalorder %s34, 0
        // Predicated region
        $region85: #{tpu_custom_call.1} parent=55 // pred_check
          %p556 = pneg %p555
        $region86: #{tpu_custom_call.1} parent=55 // pred_check_branch
          %558 = sbr.rel (%p556) target = $region88
        $region87: #{tpu_custom_call.1} parent=55 // pred_region
          %v559 = vld [vmem:[%s417] sm:$0xff]
          %v560 = vld [vmem:[%s417 + $0x8] sm:$0xff]
          %v561 = vld [vmem:[%s417 + $0x10] sm:$0xff]
          %v562 = vld [vmem:[%s417 + $0x18] sm:$0xff]
          %v563 = vld [vmem:[%s417 + $0x20] sm:$0xff]
          %v564 = vld [vmem:[%s417 + $0x28] sm:$0xff]
          %v565 = vld [vmem:[%s417 + $0x30] sm:$0xff]
          %v566 = vld [vmem:[%s417 + $0x38] sm:$0xff]
          %s567 = smul.u32 %s499, 128
          %s568 = scalar_lea.vmem [#allocation2], %s567
          %v569 = vld [vmem:[%s568] sm:$0xff]
          %v570 = vld [vmem:[%s568 + $0x8] sm:$0xff]
          %v571 = vld [vmem:[%s568 + $0x10] sm:$0xff]
          %v572 = vld [vmem:[%s568 + $0x18] sm:$0xff]
          %v573 = vld [vmem:[%s568 + $0x20] sm:$0xff]
          %v574 = vld [vmem:[%s568 + $0x28] sm:$0xff]
          %v575 = vld [vmem:[%s568 + $0x30] sm:$0xff]
          %v576 = vld [vmem:[%s568 + $0x38] sm:$0xff]
          %v577 = vld [vmem:[%s568 + $0x40] sm:$0xff]
          %v578 = vld [vmem:[%s568 + $0x48] sm:$0xff]
          %v579 = vld [vmem:[%s568 + $0x50] sm:$0xff]
          %v580 = vld [vmem:[%s568 + $0x58] sm:$0xff]
          %v581 = vld [vmem:[%s568 + $0x60] sm:$0xff]
          %v582 = vld [vmem:[%s568 + $0x68] sm:$0xff]
          %v583 = vld [vmem:[%s568 + $0x70] sm:$0xff]
          %v584 = vld [vmem:[%s568 + $0x78] sm:$0xff]
          %585 = vmatprep.subr.mxu0 0.0
          %586 = vmatpush1.msra.mxu0 %v584
          %587 = vmatprep.subr.mxu0 0.0
          %588 = vmatpush1.msra.mxu0 %v583
          %589 = vmatprep.subr.mxu0 0.0
          %590 = vmatpush1.msra.mxu0 %v582
          %591 = vmatprep.subr.mxu0 0.0
          %592 = vmatpush1.msra.mxu0 %v581
          %593 = vmatprep.subr.mxu0 0.0
          %594 = vmatpush1.msra.mxu0 %v580
          %595 = vmatprep.subr.mxu0 0.0
          %596 = vmatpush1.msra.mxu0 %v579
          %597 = vmatprep.subr.mxu0 0.0
          %598 = vmatpush1.msra.mxu0 %v578
          %599 = vmatprep.subr.mxu0 0.0
          %600 = vmatpush1.msra.mxu0 %v577
          %601 = vmatprep.subr.mxu0 0.0
          %602 = vmatpush1.msra.mxu0 %v576
          %603 = vmatprep.subr.mxu0 0.0
          %604 = vmatpush1.msra.mxu0 %v575
          %605 = vmatprep.subr.mxu0 0.0
          %606 = vmatpush1.msra.mxu0 %v574
          %607 = vmatprep.subr.mxu0 0.0
          %608 = vmatpush1.msra.mxu0 %v573
          %609 = vmatprep.subr.mxu0 0.0
          %610 = vmatpush1.msra.mxu0 %v572
          %611 = vmatprep.subr.mxu0 0.0
          %612 = vmatpush1.msra.mxu0 %v571
          %613 = vmatprep.subr.mxu0 0.0
          %614 = vmatpush1.msra.mxu0 %v570
          %615 = vmatprep.subr.mxu0 0.0
          %616 = vmatpush1.msra.mxu0 %v569
          %617 = vmatprep.subr.mxu0 0.0
          %618 = vmatpush2.msra.mxu0 0.0
          %619 = vmatprep.subr.mxu0 0.0
          %620 = vmatpush2.msra.mxu0 0.0
          %621 = vmatprep.subr.mxu0 0.0
          %622 = vmatpush2.msra.mxu0 0.0
          %623 = vmatprep.subr.mxu0 0.0
          %624 = vmatpush2.msra.mxu0 0.0
          %625 = vmatprep.subr.mxu0 0.0
          %626 = vmatpush2.msra.mxu0 0.0
          %627 = vmatprep.subr.mxu0 0.0
          %628 = vmatpush2.msra.mxu0 0.0
          %629 = vmatprep.subr.mxu0 0.0
          %630 = vmatpush2.msra.mxu0 0.0
          %631 = vmatprep.subr.mxu0 0.0
          %632 = vmatpush2.msra.mxu0 0.0
          %633 = vmatprep.subr.mxu0 0.0
          %634 = vmatpush2.msra.mxu0 0.0
          %635 = vmatprep.subr.mxu0 0.0
          %636 = vmatpush2.msra.mxu0 0.0
          %637 = vmatprep.subr.mxu0 0.0
          %638 = vmatpush2.msra.mxu0 0.0
          %639 = vmatprep.subr.mxu0 0.0
          %640 = vmatpush2.msra.mxu0 0.0
          %641 = vmatprep.subr.mxu0 0.0
          %642 = vmatpush2.msra.mxu0 0.0
          %643 = vmatprep.subr.mxu0 0.0
          %644 = vmatpush2.msra.mxu0 0.0
          %645 = vmatprep.subr.mxu0 0.0
          %646 = vmatpush2.msra.mxu0 0.0
          %647 = vmatprep.subr.mxu0 0.0
          %648 = vmatpush2.msra.mxu0 0.0
          %649 = vmatprep.mubr.f32.mxu0 0.0
          %650 = vmatmul.mubr.f32.gmra.mxu0 %v559
          %v651 = vpop.f32.mrf.mxu0
          %v652 = vadd.f32 0.0, %v651
          %v653 = vpop.f32.mrf.mxu0
          %654 = vmatprep.mubr.f32.mxu0 0.0
          %655 = vmatmul.mubr.f32.gmra.mxu0 %v560
          %v656 = vpop.f32.mrf.mxu0
          %v657 = vadd.f32 0.0, %v656
          %v658 = vpop.f32.mrf.mxu0
          %659 = vmatprep.mubr.f32.mxu0 0.0
          %660 = vmatmul.mubr.f32.gmra.mxu0 %v561
          %v661 = vpop.f32.mrf.mxu0
          %v662 = vadd.f32 0.0, %v661
          %v663 = vpop.f32.mrf.mxu0
          %664 = vmatprep.mubr.f32.mxu0 0.0
          %665 = vmatmul.mubr.f32.gmra.mxu0 %v562
          %v666 = vpop.f32.mrf.mxu0
          %v667 = vadd.f32 0.0, %v666
          %v668 = vpop.f32.mrf.mxu0
          %669 = vmatprep.mubr.f32.mxu0 0.0
          %670 = vmatmul.mubr.f32.gmra.mxu0 %v563
          %v671 = vpop.f32.mrf.mxu0
          %v672 = vadd.f32 0.0, %v671
          %v673 = vpop.f32.mrf.mxu0
          %674 = vmatprep.mubr.f32.mxu0 0.0
          %675 = vmatmul.mubr.f32.gmra.mxu0 %v564
          %v676 = vpop.f32.mrf.mxu0
          %v677 = vadd.f32 0.0, %v676
          %v678 = vpop.f32.mrf.mxu0
          %679 = vmatprep.mubr.f32.mxu0 0.0
          %680 = vmatmul.mubr.f32.gmra.mxu0 %v565
          %v681 = vpop.f32.mrf.mxu0
          %v682 = vadd.f32 0.0, %v681
          %v683 = vpop.f32.mrf.mxu0
          %684 = vmatprep.mubr.f32.mxu0 0.0
          %685 = vmatmul.mubr.f32.gmra.mxu0 %v566
          %v686 = vpop.f32.mrf.mxu0
          %v687 = vadd.f32 0.0, %v686
          %v688 = vpop.f32.mrf.mxu0
          %689 = vdwg.mxu0
          %690 = vst [vmem:[#allocation4] sm:$0xff] %v652
          %691 = vst [vmem:[#allocation4 + $0x8] sm:$0xff] %v657
          %692 = vst [vmem:[#allocation4 + $0x10] sm:$0xff] %v662
          %693 = vst [vmem:[#allocation4 + $0x18] sm:$0xff] %v667
          %694 = vst [vmem:[#allocation4 + $0x20] sm:$0xff] %v672
          %695 = vst [vmem:[#allocation4 + $0x28] sm:$0xff] %v677
          %696 = vst [vmem:[#allocation4 + $0x30] sm:$0xff] %v682
          %697 = vst [vmem:[#allocation4 + $0x38] sm:$0xff] %v687
        $region88: #{tpu_custom_call.1} parent=55 // pred_fallthru
          _
        %v698 = vld [vmem:[%s408] sm:$0xff]
        %v699 = vld [vmem:[%s408 + $0x8] sm:$0xff]
        %v700 = vld [vmem:[%s408 + $0x10] sm:$0xff]
        %v701 = vld [vmem:[%s408 + $0x18] sm:$0xff]
        %v702 = vld [vmem:[%s408 + $0x20] sm:$0xff]
        %v703 = vld [vmem:[%s408 + $0x28] sm:$0xff]
        %v704 = vld [vmem:[%s408 + $0x30] sm:$0xff]
        %v705 = vld [vmem:[%s408 + $0x38] sm:$0xff]
        %v706 = vld [vmem:[#allocation4] sm:$0xff]
        %v707 = vld [vmem:[#allocation4 + $0x8] sm:$0xff]
        %v708 = vld [vmem:[#allocation4 + $0x10] sm:$0xff]
        %v709 = vld [vmem:[#allocation4 + $0x18] sm:$0xff]
        %v710 = vld [vmem:[#allocation4 + $0x20] sm:$0xff]
        %v711 = vld [vmem:[#allocation4 + $0x28] sm:$0xff]
        %v712 = vld [vmem:[#allocation4 + $0x30] sm:$0xff]
        %v713 = vld [vmem:[#allocation4 + $0x38] sm:$0xff]
        %v714 = vld [vmem:[#allocation10] sm:$0xff]
        %v715 = vld [vmem:[#allocation10 + $0x8] sm:$0xff]
        %v716 = vld [vmem:[#allocation10 + $0x10] sm:$0xff]
        %v717 = vld [vmem:[#allocation10 + $0x18] sm:$0xff]
        %v718 = vld [vmem:[#allocation10 + $0x20] sm:$0xff]
        %v719 = vld [vmem:[#allocation10 + $0x28] sm:$0xff]
        %v720 = vld [vmem:[#allocation10 + $0x30] sm:$0xff]
        %v721 = vld [vmem:[#allocation10 + $0x38] sm:$0xff]
        %v722 = vld [vmem:[#allocation10 + $0x40] sm:$0xff]
        %v723 = vld [vmem:[#allocation10 + $0x48] sm:$0xff]
        %v724 = vld [vmem:[#allocation10 + $0x50] sm:$0xff]
        %v725 = vld [vmem:[#allocation10 + $0x58] sm:$0xff]
        %v726 = vld [vmem:[#allocation10 + $0x60] sm:$0xff]
        %v727 = vld [vmem:[#allocation10 + $0x68] sm:$0xff]
        %v728 = vld [vmem:[#allocation10 + $0x70] sm:$0xff]
        %v729 = vld [vmem:[#allocation10 + $0x78] sm:$0xff]
        %730 = vmatprep.subr.mxu0 0.0
        %731 = vmatpush1.msra.mxu0 %v729
        %732 = vmatprep.subr.mxu0 0.0
        %733 = vmatpush1.msra.mxu0 %v728
        %734 = vmatprep.subr.mxu0 0.0
        %735 = vmatpush1.msra.mxu0 %v727
        %736 = vmatprep.subr.mxu0 0.0
        %737 = vmatpush1.msra.mxu0 %v726
        %738 = vmatprep.subr.mxu0 0.0
        %739 = vmatpush1.msra.mxu0 %v725
        %740 = vmatprep.subr.mxu0 0.0
        %741 = vmatpush1.msra.mxu0 %v724
        %742 = vmatprep.subr.mxu0 0.0
        %743 = vmatpush1.msra.mxu0 %v723
        %744 = vmatprep.subr.mxu0 0.0
        %745 = vmatpush1.msra.mxu0 %v722
        %746 = vmatprep.subr.mxu0 0.0
        %747 = vmatpush1.msra.mxu0 %v721
        %748 = vmatprep.subr.mxu0 0.0
        %749 = vmatpush1.msra.mxu0 %v720
        %750 = vmatprep.subr.mxu0 0.0
        %751 = vmatpush1.msra.mxu0 %v719
        %752 = vmatprep.subr.mxu0 0.0
        %753 = vmatpush1.msra.mxu0 %v718
        %754 = vmatprep.subr.mxu0 0.0
        %755 = vmatpush1.msra.mxu0 %v717
        %756 = vmatprep.subr.mxu0 0.0
        %757 = vmatpush1.msra.mxu0 %v716
        %758 = vmatprep.subr.mxu0 0.0
        %759 = vmatpush1.msra.mxu0 %v715
        %760 = vmatprep.subr.mxu0 0.0
        %761 = vmatpush1.msra.mxu0 %v714
        %762 = vmatprep.subr.mxu0 0.0
        %763 = vmatpush2.msra.mxu0 0.0
        %764 = vmatprep.subr.mxu0 0.0
        %765 = vmatpush2.msra.mxu0 0.0
        %766 = vmatprep.subr.mxu0 0.0
        %767 = vmatpush2.msra.mxu0 0.0
        %768 = vmatprep.subr.mxu0 0.0
        %769 = vmatpush2.msra.mxu0 0.0
        %770 = vmatprep.subr.mxu0 0.0
        %771 = vmatpush2.msra.mxu0 0.0
        %772 = vmatprep.subr.mxu0 0.0
        %773 = vmatpush2.msra.mxu0 0.0
        %774 = vmatprep.subr.mxu0 0.0
        %775 = vmatpush2.msra.mxu0 0.0
        %776 = vmatprep.subr.mxu0 0.0
        %777 = vmatpush2.msra.mxu0 0.0
        %778 = vmatprep.subr.mxu0 0.0
        %779 = vmatpush2.msra.mxu0 0.0
        %780 = vmatprep.subr.mxu0 0.0
        %781 = vmatpush2.msra.mxu0 0.0
        %782 = vmatprep.subr.mxu0 0.0
        %783 = vmatpush2.msra.mxu0 0.0
        %784 = vmatprep.subr.mxu0 0.0
        %785 = vmatpush2.msra.mxu0 0.0
        %786 = vmatprep.subr.mxu0 0.0
        %787 = vmatpush2.msra.mxu0 0.0
        %788 = vmatprep.subr.mxu0 0.0
        %789 = vmatpush2.msra.mxu0 0.0
        %790 = vmatprep.subr.mxu0 0.0
        %791 = vmatpush2.msra.mxu0 0.0
        %792 = vmatprep.subr.mxu0 0.0
        %793 = vmatpush2.msra.mxu0 0.0
        %794 = vmatprep.mubr.f32.mxu0 0.0
        %795 = vmatmul.mubr.f32.gmra.mxu0 %v706
        %v796 = vpop.f32.mrf.mxu0
        %v797 = vadd.f32 0.0, %v796
        %v798 = vpop.f32.mrf.mxu0
        %799 = vmatprep.mubr.f32.mxu0 0.0
        %800 = vmatmul.mubr.f32.gmra.mxu0 %v707
        %v801 = vpop.f32.mrf.mxu0
        %v802 = vadd.f32 0.0, %v801
        %v803 = vpop.f32.mrf.mxu0
        %804 = vmatprep.mubr.f32.mxu0 0.0
        %805 = vmatmul.mubr.f32.gmra.mxu0 %v708
        %v806 = vpop.f32.mrf.mxu0
        %v807 = vadd.f32 0.0, %v806
        %v808 = vpop.f32.mrf.mxu0
        %809 = vmatprep.mubr.f32.mxu0 0.0
        %810 = vmatmul.mubr.f32.gmra.mxu0 %v709
        %v811 = vpop.f32.mrf.mxu0
        %v812 = vadd.f32 0.0, %v811
        %v813 = vpop.f32.mrf.mxu0
        %814 = vmatprep.mubr.f32.mxu0 0.0
        %815 = vmatmul.mubr.f32.gmra.mxu0 %v710
        %v816 = vpop.f32.mrf.mxu0
        %v817 = vadd.f32 0.0, %v816
        %v818 = vpop.f32.mrf.mxu0
        %819 = vmatprep.mubr.f32.mxu0 0.0
        %820 = vmatmul.mubr.f32.gmra.mxu0 %v711
        %v821 = vpop.f32.mrf.mxu0
        %v822 = vadd.f32 0.0, %v821
        %v823 = vpop.f32.mrf.mxu0
        %824 = vmatprep.mubr.f32.mxu0 0.0
        %825 = vmatmul.mubr.f32.gmra.mxu0 %v712
        %v826 = vpop.f32.mrf.mxu0
        %v827 = vadd.f32 0.0, %v826
        %v828 = vpop.f32.mrf.mxu0
        %829 = vmatprep.mubr.f32.mxu0 0.0
        %830 = vmatmul.mubr.f32.gmra.mxu0 %v713
        %v831 = vpop.f32.mrf.mxu0
        %v832 = vadd.f32 0.0, %v831
        %v833 = vpop.f32.mrf.mxu0
        %834 = vdwg.mxu0
        %v835 = vadd.f32 %v698, %v797
        %v836 = vadd.f32 %v699, %v802
        %v837 = vadd.f32 %v700, %v807
        %v838 = vadd.f32 %v701, %v812
        %v839 = vadd.f32 %v702, %v817
        %v840 = vadd.f32 %v703, %v822
        %v841 = vadd.f32 %v704, %v827
        %v842 = vadd.f32 %v705, %v832
        %v843 = vmax.f32 %v835, 0.0
        %v844 = vmax.f32 %v836, 0.0
        %v845 = vmax.f32 %v837, 0.0
        %v846 = vmax.f32 %v838, 0.0
        %v847 = vmax.f32 %v839, 0.0
        %v848 = vmax.f32 %v840, 0.0
        %v849 = vmax.f32 %v841, 0.0
        %v850 = vmax.f32 %v842, 0.0
        %v851 = vld [vmem:[#allocation11] sm:$0xff]
        %v852 = vld [vmem:[#allocation11 + $0x8] sm:$0xff]
        %v853 = vld [vmem:[#allocation11 + $0x10] sm:$0xff]
        %v854 = vld [vmem:[#allocation11 + $0x18] sm:$0xff]
        %v855 = vld [vmem:[#allocation11 + $0x20] sm:$0xff]
        %v856 = vld [vmem:[#allocation11 + $0x28] sm:$0xff]
        %v857 = vld [vmem:[#allocation11 + $0x30] sm:$0xff]
        %v858 = vld [vmem:[#allocation11 + $0x38] sm:$0xff]
        %v859 = vld [vmem:[#allocation11 + $0x40] sm:$0xff]
        %v860 = vld [vmem:[#allocation11 + $0x48] sm:$0xff]
        %v861 = vld [vmem:[#allocation11 + $0x50] sm:$0xff]
        %v862 = vld [vmem:[#allocation11 + $0x58] sm:$0xff]
        %v863 = vld [vmem:[#allocation11 + $0x60] sm:$0xff]
        %v864 = vld [vmem:[#allocation11 + $0x68] sm:$0xff]
        %v865 = vld [vmem:[#allocation11 + $0x70] sm:$0xff]
        %v866 = vld [vmem:[#allocation11 + $0x78] sm:$0xff]
        %v867 = vld [vmem:[%s4] sm:$0x1]
        %v869 = vlaneseq
        %v870 = vshrl.u32 %v869, 7
        %v871 = vsub.s32 0, %v870
        %v872 = vrot.slane %v867, %v871
        %874 = vmatprep.subr.mxu0 0.0
        %875 = vmatpush1.msra.mxu0 %v866
        %876 = vmatprep.subr.mxu0 0.0
        %877 = vmatpush1.msra.mxu0 %v865
        %878 = vmatprep.subr.mxu0 0.0
        %879 = vmatpush1.msra.mxu0 %v864
        %880 = vmatprep.subr.mxu0 0.0
        %881 = vmatpush1.msra.mxu0 %v863
        %882 = vmatprep.subr.mxu0 0.0
        %883 = vmatpush1.msra.mxu0 %v862
        %884 = vmatprep.subr.mxu0 0.0
        %885 = vmatpush1.msra.mxu0 %v861
        %886 = vmatprep.subr.mxu0 0.0
        %887 = vmatpush1.msra.mxu0 %v860
        %888 = vmatprep.subr.mxu0 0.0
        %889 = vmatpush1.msra.mxu0 %v859
        %890 = vmatprep.subr.mxu0 0.0
        %891 = vmatpush1.msra.mxu0 %v858
        %892 = vmatprep.subr.mxu0 0.0
        %893 = vmatpush1.msra.mxu0 %v857
        %894 = vmatprep.subr.mxu0 0.0
        %895 = vmatpush1.msra.mxu0 %v856
        %896 = vmatprep.subr.mxu0 0.0
        %897 = vmatpush1.msra.mxu0 %v855
        %898 = vmatprep.subr.mxu0 0.0
        %899 = vmatpush1.msra.mxu0 %v854
        %900 = vmatprep.subr.mxu0 0.0
        %901 = vmatpush1.msra.mxu0 %v853
        %902 = vmatprep.subr.mxu0 0.0
        %903 = vmatpush1.msra.mxu0 %v852
        %904 = vmatprep.subr.mxu0 0.0
        %905 = vmatpush1.msra.mxu0 %v851
        %906 = vmatprep.subr.mxu0 0.0
        %907 = vmatpush2.msra.mxu0 0.0
        %908 = vmatprep.subr.mxu0 0.0
        %909 = vmatpush2.msra.mxu0 0.0
        %910 = vmatprep.subr.mxu0 0.0
        %911 = vmatpush2.msra.mxu0 0.0
        %912 = vmatprep.subr.mxu0 0.0
        %913 = vmatpush2.msra.mxu0 0.0
        %914 = vmatprep.subr.mxu0 0.0
        %915 = vmatpush2.msra.mxu0 0.0
        %916 = vmatprep.subr.mxu0 0.0
        %917 = vmatpush2.msra.mxu0 0.0
        %918 = vmatprep.subr.mxu0 0.0
        %919 = vmatpush2.msra.mxu0 0.0
        %920 = vmatprep.subr.mxu0 0.0
        %921 = vmatpush2.msra.mxu0 0.0
        %922 = vmatprep.subr.mxu0 0.0
        %923 = vmatpush2.msra.mxu0 0.0
        %924 = vmatprep.subr.mxu0 0.0
        %925 = vmatpush2.msra.mxu0 0.0
        %926 = vmatprep.subr.mxu0 0.0
        %927 = vmatpush2.msra.mxu0 0.0
        %928 = vmatprep.subr.mxu0 0.0
        %929 = vmatpush2.msra.mxu0 0.0
        %930 = vmatprep.subr.mxu0 0.0
        %931 = vmatpush2.msra.mxu0 0.0
        %932 = vmatprep.subr.mxu0 0.0
        %933 = vmatpush2.msra.mxu0 0.0
        %934 = vmatprep.subr.mxu0 0.0
        %935 = vmatpush2.msra.mxu0 0.0
        %936 = vmatprep.subr.mxu0 0.0
        %937 = vmatpush2.msra.mxu0 0.0
        %938 = vmatprep.mubr.f32.mxu0 0.0
        %939 = vmatmul.mubr.f32.gmra.mxu0 %v843
        %v940 = vpop.f32.mrf.mxu0
        %v941 = vadd.f32 %v872, %v940
        %v942 = vpop.f32.mrf.mxu0
        %943 = vmatprep.mubr.f32.mxu0 0.0
        %944 = vmatmul.mubr.f32.gmra.mxu0 %v844
        %v945 = vpop.f32.mrf.mxu0
        %v946 = vadd.f32 %v872, %v945
        %v947 = vpop.f32.mrf.mxu0
        %948 = vmatprep.mubr.f32.mxu0 0.0
        %949 = vmatmul.mubr.f32.gmra.mxu0 %v845
        %v950 = vpop.f32.mrf.mxu0
        %v951 = vadd.f32 %v872, %v950
        %v952 = vpop.f32.mrf.mxu0
        %953 = vmatprep.mubr.f32.mxu0 0.0
        %954 = vmatmul.mubr.f32.gmra.mxu0 %v846
        %v955 = vpop.f32.mrf.mxu0
        %v956 = vadd.f32 %v872, %v955
        %v957 = vpop.f32.mrf.mxu0
        %958 = vmatprep.mubr.f32.mxu0 0.0
        %959 = vmatmul.mubr.f32.gmra.mxu0 %v847
        %v960 = vpop.f32.mrf.mxu0
        %v961 = vadd.f32 %v872, %v960
        %v962 = vpop.f32.mrf.mxu0
        %963 = vmatprep.mubr.f32.mxu0 0.0
        %964 = vmatmul.mubr.f32.gmra.mxu0 %v848
        %v965 = vpop.f32.mrf.mxu0
        %v966 = vadd.f32 %v872, %v965
        %v967 = vpop.f32.mrf.mxu0
        %968 = vmatprep.mubr.f32.mxu0 0.0
        %969 = vmatmul.mubr.f32.gmra.mxu0 %v849
        %v970 = vpop.f32.mrf.mxu0
        %v971 = vadd.f32 %v872, %v970
        %v972 = vpop.f32.mrf.mxu0
        %973 = vmatprep.mubr.f32.mxu0 0.0
        %974 = vmatmul.mubr.f32.gmra.mxu0 %v850
        %v975 = vpop.f32.mrf.mxu0
        %v976 = vadd.f32 %v872, %v975
        %v977 = vpop.f32.mrf.mxu0
        %978 = vdwg.mxu0
        %v979 = vmul.f32 %v941, %v535
        %v980 = vmul.f32 %v946, %v536
        %v981 = vmul.f32 %v951, %v537
        %v982 = vmul.f32 %v956, %v538
        %v983 = vmul.f32 %v961, %v539
        %v984 = vmul.f32 %v966, %v540
        %v985 = vmul.f32 %v971, %v541
        %v986 = vmul.f32 %v976, %v542
        %s987 = smul.u32 %s498, 128
        %s988 = sadd.s32 %s500, %s987
        %s989 = scalar_lea.vmem [#allocation2], %s988
        %990 = vst [vmem:[%s989] sm:$0xff] %v979
        %991 = vst [vmem:[%s989 + $0x8] sm:$0xff] %v980
        %992 = vst [vmem:[%s989 + $0x10] sm:$0xff] %v981
        %993 = vst [vmem:[%s989 + $0x18] sm:$0xff] %v982
        %994 = vst [vmem:[%s989 + $0x20] sm:$0xff] %v983
        %995 = vst [vmem:[%s989 + $0x28] sm:$0xff] %v984
        %996 = vst [vmem:[%s989 + $0x30] sm:$0xff] %v985
        %997 = vst [vmem:[%s989 + $0x38] sm:$0xff] %v986
        %v998 = vld [vmem:[%s434] sm:$0xff]
        %v999 = vld [vmem:[%s434 + $0x8] sm:$0xff]
        %v1000 = vld [vmem:[%s434 + $0x10] sm:$0xff]
        %v1001 = vld [vmem:[%s434 + $0x18] sm:$0xff]
        %v1002 = vld [vmem:[%s434 + $0x20] sm:$0xff]
        %v1003 = vld [vmem:[%s434 + $0x28] sm:$0xff]
        %v1004 = vld [vmem:[%s434 + $0x30] sm:$0xff]
        %v1005 = vld [vmem:[%s434 + $0x38] sm:$0xff]
        %v1006 = vld [vmem:[%s434 + $0x40] sm:$0xff]
        %v1007 = vld [vmem:[%s434 + $0x48] sm:$0xff]
        %v1008 = vld [vmem:[%s434 + $0x50] sm:$0xff]
        %v1009 = vld [vmem:[%s434 + $0x58] sm:$0xff]
        %v1010 = vld [vmem:[%s434 + $0x60] sm:$0xff]
        %v1011 = vld [vmem:[%s434 + $0x68] sm:$0xff]
        %v1012 = vld [vmem:[%s434 + $0x70] sm:$0xff]
        %v1013 = vld [vmem:[%s434 + $0x78] sm:$0xff]
        %1014 = vmatprep.subr.mxu0 0.0
        %1015 = vmatpush1.msra.mxu0 %v1013
        %1016 = vmatprep.subr.mxu0 0.0
        %1017 = vmatpush1.msra.mxu0 %v1012
        %1018 = vmatprep.subr.mxu0 0.0
        %1019 = vmatpush1.msra.mxu0 %v1011
        %1020 = vmatprep.subr.mxu0 0.0
        %1021 = vmatpush1.msra.mxu0 %v1010
        %1022 = vmatprep.subr.mxu0 0.0
        %1023 = vmatpush1.msra.mxu0 %v1009
        %1024 = vmatprep.subr.mxu0 0.0
        %1025 = vmatpush1.msra.mxu0 %v1008
        %1026 = vmatprep.subr.mxu0 0.0
        %1027 = vmatpush1.msra.mxu0 %v1007
        %1028 = vmatprep.subr.mxu0 0.0
        %1029 = vmatpush1.msra.mxu0 %v1006
        %1030 = vmatprep.subr.mxu0 0.0
        %1031 = vmatpush1.msra.mxu0 %v1005
        %1032 = vmatprep.subr.mxu0 0.0
        %1033 = vmatpush1.msra.mxu0 %v1004
        %1034 = vmatprep.subr.mxu0 0.0
        %1035 = vmatpush1.msra.mxu0 %v1003
        %1036 = vmatprep.subr.mxu0 0.0
        %1037 = vmatpush1.msra.mxu0 %v1002
        %1038 = vmatprep.subr.mxu0 0.0
        %1039 = vmatpush1.msra.mxu0 %v1001
        %1040 = vmatprep.subr.mxu0 0.0
        %1041 = vmatpush1.msra.mxu0 %v1000
        %1042 = vmatprep.subr.mxu0 0.0
        %1043 = vmatpush1.msra.mxu0 %v999
        %1044 = vmatprep.subr.mxu0 0.0
        %1045 = vmatpush1.msra.mxu0 %v998
        %1046 = vmatprep.subr.mxu0 0.0
        %1047 = vmatpush2.msra.mxu0 0.0
        %1048 = vmatprep.subr.mxu0 0.0
        %1049 = vmatpush2.msra.mxu0 0.0
        %1050 = vmatprep.subr.mxu0 0.0
        %1051 = vmatpush2.msra.mxu0 0.0
        %1052 = vmatprep.subr.mxu0 0.0
        %1053 = vmatpush2.msra.mxu0 0.0
        %1054 = vmatprep.subr.mxu0 0.0
        %1055 = vmatpush2.msra.mxu0 0.0
        %1056 = vmatprep.subr.mxu0 0.0
        %1057 = vmatpush2.msra.mxu0 0.0
        %1058 = vmatprep.subr.mxu0 0.0
        %1059 = vmatpush2.msra.mxu0 0.0
        %1060 = vmatprep.subr.mxu0 0.0
        %1061 = vmatpush2.msra.mxu0 0.0
        %1062 = vmatprep.subr.mxu0 0.0
        %1063 = vmatpush2.msra.mxu0 0.0
        %1064 = vmatprep.subr.mxu0 0.0
        %1065 = vmatpush2.msra.mxu0 0.0
        %1066 = vmatprep.subr.mxu0 0.0
        %1067 = vmatpush2.msra.mxu0 0.0
        %1068 = vmatprep.subr.mxu0 0.0
        %1069 = vmatpush2.msra.mxu0 0.0
        %1070 = vmatprep.subr.mxu0 0.0
        %1071 = vmatpush2.msra.mxu0 0.0
        %1072 = vmatprep.subr.mxu0 0.0
        %1073 = vmatpush2.msra.mxu0 0.0
        %1074 = vmatprep.subr.mxu0 0.0
        %1075 = vmatpush2.msra.mxu0 0.0
        %1076 = vmatprep.subr.mxu0 0.0
        %1077 = vmatpush2.msra.mxu0 0.0
        %1078 = vmatprep.mubr.f32.mxu0 0.0
        %1079 = vmatmul.mubr.f32.gmra.mxu0 %v979
        %v1080 = vpop.f32.mrf.mxu0
        %v1081 = vadd.f32 0.0, %v1080
        %v1082 = vpop.f32.mrf.mxu0
        %1083 = vmatprep.mubr.f32.mxu0 0.0
        %1084 = vmatmul.mubr.f32.gmra.mxu0 %v980
        %v1085 = vpop.f32.mrf.mxu0
        %v1086 = vadd.f32 0.0, %v1085
        %v1087 = vpop.f32.mrf.mxu0
        %1088 = vmatprep.mubr.f32.mxu0 0.0
        %1089 = vmatmul.mubr.f32.gmra.mxu0 %v981
        %v1090 = vpop.f32.mrf.mxu0
        %v1091 = vadd.f32 0.0, %v1090
        %v1092 = vpop.f32.mrf.mxu0
        %1093 = vmatprep.mubr.f32.mxu0 0.0
        %1094 = vmatmul.mubr.f32.gmra.mxu0 %v982
        %v1095 = vpop.f32.mrf.mxu0
        %v1096 = vadd.f32 0.0, %v1095
        %v1097 = vpop.f32.mrf.mxu0
        %1098 = vmatprep.mubr.f32.mxu0 0.0
        %1099 = vmatmul.mubr.f32.gmra.mxu0 %v983
        %v1100 = vpop.f32.mrf.mxu0
        %v1101 = vadd.f32 0.0, %v1100
        %v1102 = vpop.f32.mrf.mxu0
        %1103 = vmatprep.mubr.f32.mxu0 0.0
        %1104 = vmatmul.mubr.f32.gmra.mxu0 %v984
        %v1105 = vpop.f32.mrf.mxu0
        %v1106 = vadd.f32 0.0, %v1105
        %v1107 = vpop.f32.mrf.mxu0
        %1108 = vmatprep.mubr.f32.mxu0 0.0
        %1109 = vmatmul.mubr.f32.gmra.mxu0 %v985
        %v1110 = vpop.f32.mrf.mxu0
        %v1111 = vadd.f32 0.0, %v1110
        %v1112 = vpop.f32.mrf.mxu0
        %1113 = vmatprep.mubr.f32.mxu0 0.0
        %1114 = vmatmul.mubr.f32.gmra.mxu0 %v986
        %v1115 = vpop.f32.mrf.mxu0
        %v1116 = vadd.f32 0.0, %v1115
        %v1117 = vpop.f32.mrf.mxu0
        %1118 = vdwg.mxu0
        // Predicated region
        $region89: #{tpu_custom_call.1} parent=55 // pred_check
          %p1119 = pneg %p543
        $region90: #{tpu_custom_call.1} parent=55 // pred_check_branch
          %1121 = sbr.rel (%p1119) target = $region92
        $region91: #{tpu_custom_call.1} parent=55 // pred_region
          %s1122 = scalar_lea.vmem [#allocation3], %s500
          %1123 = vst [vmem:[%s1122] sm:$0xff] %v1081
          %1124 = vst [vmem:[%s1122 + $0x8] sm:$0xff] %v1086
          %1125 = vst [vmem:[%s1122 + $0x10] sm:$0xff] %v1091
          %1126 = vst [vmem:[%s1122 + $0x18] sm:$0xff] %v1096
          %1127 = vst [vmem:[%s1122 + $0x20] sm:$0xff] %v1101
          %1128 = vst [vmem:[%s1122 + $0x28] sm:$0xff] %v1106
          %1129 = vst [vmem:[%s1122 + $0x30] sm:$0xff] %v1111
          %1130 = vst [vmem:[%s1122 + $0x38] sm:$0xff] %v1116
        $region92: #{tpu_custom_call.1} parent=55 // pred_fallthru
          _
        // Predicated region
        $region93: #{tpu_custom_call.1} parent=55 // pred_check
          %p1131 = pneg %p555
        $region94: #{tpu_custom_call.1} parent=55 // pred_check_branch
          %1133 = sbr.rel (%p1131) target = $region96
        $region95: #{tpu_custom_call.1} parent=55 // pred_region
          %s1134 = scalar_lea.vmem [#allocation3], %s500
          %v1135 = vld [vmem:[%s1134] sm:$0xff]
          %v1136 = vld [vmem:[%s1134 + $0x8] sm:$0xff]
          %v1137 = vld [vmem:[%s1134 + $0x10] sm:$0xff]
          %v1138 = vld [vmem:[%s1134 + $0x18] sm:$0xff]
          %v1139 = vld [vmem:[%s1134 + $0x20] sm:$0xff]
          %v1140 = vld [vmem:[%s1134 + $0x28] sm:$0xff]
          %v1141 = vld [vmem:[%s1134 + $0x30] sm:$0xff]
          %v1142 = vld [vmem:[%s1134 + $0x38] sm:$0xff]
          %v1143 = vadd.f32 %v1135, %v1081
          %v1144 = vadd.f32 %v1136, %v1086
          %v1145 = vadd.f32 %v1137, %v1091
          %v1146 = vadd.f32 %v1138, %v1096
          %v1147 = vadd.f32 %v1139, %v1101
          %v1148 = vadd.f32 %v1140, %v1106
          %v1149 = vadd.f32 %v1141, %v1111
          %v1150 = vadd.f32 %v1142, %v1116
          %1151 = vst [vmem:[%s1134] sm:$0xff] %v1143
          %1152 = vst [vmem:[%s1134 + $0x8] sm:$0xff] %v1144
          %1153 = vst [vmem:[%s1134 + $0x10] sm:$0xff] %v1145
          %1154 = vst [vmem:[%s1134 + $0x18] sm:$0xff] %v1146
          %1155 = vst [vmem:[%s1134 + $0x20] sm:$0xff] %v1147
          %1156 = vst [vmem:[%s1134 + $0x28] sm:$0xff] %v1148
          %1157 = vst [vmem:[%s1134 + $0x30] sm:$0xff] %v1149
          %1158 = vst [vmem:[%s1134 + $0x38] sm:$0xff] %v1150
        $region96: #{tpu_custom_call.1} parent=55 // pred_fallthru
          _
        %p1159 = scmp.eq.s32.totalorder %s34, 3
        // Predicated region
        $region97: #{tpu_custom_call.1} parent=55 // pred_check
          %p1160 = pneg %p1159
        $region98: #{tpu_custom_call.1} parent=55 // pred_check_branch
          %1162 = sbr.rel (%p1160) target = $region100
        $region99: #{tpu_custom_call.1} parent=55 // pred_region
          %s1163 = scalar_lea.vmem [#allocation3], %s500
          %v1164 = vld [vmem:[%s1163] sm:$0xff]
          %v1165 = vld [vmem:[%s1163 + $0x8] sm:$0xff]
          %v1166 = vld [vmem:[%s1163 + $0x10] sm:$0xff]
          %v1167 = vld [vmem:[%s1163 + $0x18] sm:$0xff]
          %v1168 = vld [vmem:[%s1163 + $0x20] sm:$0xff]
          %v1169 = vld [vmem:[%s1163 + $0x28] sm:$0xff]
          %v1170 = vld [vmem:[%s1163 + $0x30] sm:$0xff]
          %v1171 = vld [vmem:[%s1163 + $0x38] sm:$0xff]
          %v1172 = vld [vmem:[%s6] sm:$0x1]
          %v1174 = vlaneseq
          %v1175 = vshrl.u32 %v1174, 7
          %v1176 = vsub.s32 0, %v1175
          %v1177 = vrot.slane %v1172, %v1176
          %v1179 = vadd.f32 %v1164, %v1177
          %v1180 = vadd.f32 %v1165, %v1177
          %v1181 = vadd.f32 %v1166, %v1177
          %v1182 = vadd.f32 %v1167, %v1177
          %v1183 = vadd.f32 %v1168, %v1177
          %v1184 = vadd.f32 %v1169, %v1177
          %v1185 = vadd.f32 %v1170, %v1177
          %v1186 = vadd.f32 %v1171, %v1177
          %v1187 = vmax.f32 %v1179, 0.0
          %v1188 = vmax.f32 %v1180, 0.0
          %v1189 = vmax.f32 %v1181, 0.0
          %v1190 = vmax.f32 %v1182, 0.0
          %v1191 = vmax.f32 %v1183, 0.0
          %v1192 = vmax.f32 %v1184, 0.0
          %v1193 = vmax.f32 %v1185, 0.0
          %v1194 = vmax.f32 %v1186, 0.0
          %v1195 = vld [vmem:[#allocation14] sm:$0xff]
          %v1196 = vld [vmem:[#allocation14 + $0x8] sm:$0xff]
          %v1197 = vld [vmem:[#allocation14 + $0x10] sm:$0xff]
          %v1198 = vld [vmem:[#allocation14 + $0x18] sm:$0xff]
          %v1199 = vld [vmem:[#allocation14 + $0x20] sm:$0xff]
          %v1200 = vld [vmem:[#allocation14 + $0x28] sm:$0xff]
          %v1201 = vld [vmem:[#allocation14 + $0x30] sm:$0xff]
          %v1202 = vld [vmem:[#allocation14 + $0x38] sm:$0xff]
          %v1203 = vld [vmem:[#allocation14 + $0x40] sm:$0xff]
          %v1204 = vld [vmem:[#allocation14 + $0x48] sm:$0xff]
          %v1205 = vld [vmem:[#allocation14 + $0x50] sm:$0xff]
          %v1206 = vld [vmem:[#allocation14 + $0x58] sm:$0xff]
          %v1207 = vld [vmem:[#allocation14 + $0x60] sm:$0xff]
          %v1208 = vld [vmem:[#allocation14 + $0x68] sm:$0xff]
          %v1209 = vld [vmem:[#allocation14 + $0x70] sm:$0xff]
          %v1210 = vld [vmem:[#allocation14 + $0x78] sm:$0xff]
          %v1211 = vld [vmem:[%s8] sm:$0x1]
          %v1213 = vlaneseq
          %v1214 = vshrl.u32 %v1213, 7
          %v1215 = vsub.s32 0, %v1214
          %v1216 = vrot.slane %v1211, %v1215
          %1218 = vmatprep.subr.mxu0 0.0
          %1219 = vmatpush1.msra.mxu0 %v1210
          %1220 = vmatprep.subr.mxu0 0.0
          %1221 = vmatpush1.msra.mxu0 %v1209
          %1222 = vmatprep.subr.mxu0 0.0
          %1223 = vmatpush1.msra.mxu0 %v1208
          %1224 = vmatprep.subr.mxu0 0.0
          %1225 = vmatpush1.msra.mxu0 %v1207
          %1226 = vmatprep.subr.mxu0 0.0
          %1227 = vmatpush1.msra.mxu0 %v1206
          %1228 = vmatprep.subr.mxu0 0.0
          %1229 = vmatpush1.msra.mxu0 %v1205
          %1230 = vmatprep.subr.mxu0 0.0
          %1231 = vmatpush1.msra.mxu0 %v1204
          %1232 = vmatprep.subr.mxu0 0.0
          %1233 = vmatpush1.msra.mxu0 %v1203
          %1234 = vmatprep.subr.mxu0 0.0
          %1235 = vmatpush1.msra.mxu0 %v1202
          %1236 = vmatprep.subr.mxu0 0.0
          %1237 = vmatpush1.msra.mxu0 %v1201
          %1238 = vmatprep.subr.mxu0 0.0
          %1239 = vmatpush1.msra.mxu0 %v1200
          %1240 = vmatprep.subr.mxu0 0.0
          %1241 = vmatpush1.msra.mxu0 %v1199
          %1242 = vmatprep.subr.mxu0 0.0
          %1243 = vmatpush1.msra.mxu0 %v1198
          %1244 = vmatprep.subr.mxu0 0.0
          %1245 = vmatpush1.msra.mxu0 %v1197
          %1246 = vmatprep.subr.mxu0 0.0
          %1247 = vmatpush1.msra.mxu0 %v1196
          %1248 = vmatprep.subr.mxu0 0.0
          %1249 = vmatpush1.msra.mxu0 %v1195
          %1250 = vmatprep.subr.mxu0 0.0
          %1251 = vmatpush2.msra.mxu0 0.0
          %1252 = vmatprep.subr.mxu0 0.0
          %1253 = vmatpush2.msra.mxu0 0.0
          %1254 = vmatprep.subr.mxu0 0.0
          %1255 = vmatpush2.msra.mxu0 0.0
          %1256 = vmatprep.subr.mxu0 0.0
          %1257 = vmatpush2.msra.mxu0 0.0
          %1258 = vmatprep.subr.mxu0 0.0
          %1259 = vmatpush2.msra.mxu0 0.0
          %1260 = vmatprep.subr.mxu0 0.0
          %1261 = vmatpush2.msra.mxu0 0.0
          %1262 = vmatprep.subr.mxu0 0.0
          %1263 = vmatpush2.msra.mxu0 0.0
          %1264 = vmatprep.subr.mxu0 0.0
          %1265 = vmatpush2.msra.mxu0 0.0
          %1266 = vmatprep.subr.mxu0 0.0
          %1267 = vmatpush2.msra.mxu0 0.0
          %1268 = vmatprep.subr.mxu0 0.0
          %1269 = vmatpush2.msra.mxu0 0.0
          %1270 = vmatprep.subr.mxu0 0.0
          %1271 = vmatpush2.msra.mxu0 0.0
          %1272 = vmatprep.subr.mxu0 0.0
          %1273 = vmatpush2.msra.mxu0 0.0
          %1274 = vmatprep.subr.mxu0 0.0
          %1275 = vmatpush2.msra.mxu0 0.0
          %1276 = vmatprep.subr.mxu0 0.0
          %1277 = vmatpush2.msra.mxu0 0.0
          %1278 = vmatprep.subr.mxu0 0.0
          %1279 = vmatpush2.msra.mxu0 0.0
          %1280 = vmatprep.subr.mxu0 0.0
          %1281 = vmatpush2.msra.mxu0 0.0
          %1282 = vmatprep.mubr.f32.mxu0 0.0
          %1283 = vmatmul.mubr.f32.gmra.mxu0 %v1187
          %v1284 = vpop.f32.mrf.mxu0
          %v1285 = vadd.f32 %v1216, %v1284
          %v1286 = vpop.f32.mrf.mxu0
          %1287 = vmatprep.mubr.f32.mxu0 0.0
          %1288 = vmatmul.mubr.f32.gmra.mxu0 %v1188
          %v1289 = vpop.f32.mrf.mxu0
          %v1290 = vadd.f32 %v1216, %v1289
          %v1291 = vpop.f32.mrf.mxu0
          %1292 = vmatprep.mubr.f32.mxu0 0.0
          %1293 = vmatmul.mubr.f32.gmra.mxu0 %v1189
          %v1294 = vpop.f32.mrf.mxu0
          %v1295 = vadd.f32 %v1216, %v1294
          %v1296 = vpop.f32.mrf.mxu0
          %1297 = vmatprep.mubr.f32.mxu0 0.0
          %1298 = vmatmul.mubr.f32.gmra.mxu0 %v1190
          %v1299 = vpop.f32.mrf.mxu0
          %v1300 = vadd.f32 %v1216, %v1299
          %v1301 = vpop.f32.mrf.mxu0
          %1302 = vmatprep.mubr.f32.mxu0 0.0
          %1303 = vmatmul.mubr.f32.gmra.mxu0 %v1191
          %v1304 = vpop.f32.mrf.mxu0
          %v1305 = vadd.f32 %v1216, %v1304
          %v1306 = vpop.f32.mrf.mxu0
          %1307 = vmatprep.mubr.f32.mxu0 0.0
          %1308 = vmatmul.mubr.f32.gmra.mxu0 %v1192
          %v1309 = vpop.f32.mrf.mxu0
          %v1310 = vadd.f32 %v1216, %v1309
          %v1311 = vpop.f32.mrf.mxu0
          %1312 = vmatprep.mubr.f32.mxu0 0.0
          %1313 = vmatmul.mubr.f32.gmra.mxu0 %v1193
          %v1314 = vpop.f32.mrf.mxu0
          %v1315 = vadd.f32 %v1216, %v1314
          %v1316 = vpop.f32.mrf.mxu0
          %1317 = vmatprep.mubr.f32.mxu0 0.0
          %1318 = vmatmul.mubr.f32.gmra.mxu0 %v1194
          %v1319 = vpop.f32.mrf.mxu0
          %v1320 = vadd.f32 %v1216, %v1319
          %v1321 = vpop.f32.mrf.mxu0
          %1322 = vdwg.mxu0
          %v1323 = vmul.f32 %v1285, %v535
          %v1324 = vmul.f32 %v1290, %v536
          %v1325 = vmul.f32 %v1295, %v537
          %v1326 = vmul.f32 %v1300, %v538
          %v1327 = vmul.f32 %v1305, %v539
          %v1328 = vmul.f32 %v1310, %v540
          %v1329 = vmul.f32 %v1315, %v541
          %v1330 = vmul.f32 %v1320, %v542
          %1331 = vst [vmem:[%s482] sm:$0xff] %v1323
          %1332 = vst [vmem:[%s482 + $0x8] sm:$0xff] %v1324
          %1333 = vst [vmem:[%s482 + $0x10] sm:$0xff] %v1325
          %1334 = vst [vmem:[%s482 + $0x18] sm:$0xff] %v1326
          %1335 = vst [vmem:[%s482 + $0x20] sm:$0xff] %v1327
          %1336 = vst [vmem:[%s482 + $0x28] sm:$0xff] %v1328
          %1337 = vst [vmem:[%s482 + $0x30] sm:$0xff] %v1329
          %1338 = vst [vmem:[%s482 + $0x38] sm:$0xff] %v1330
        $region100: #{tpu_custom_call.1} parent=55 // pred_fallthru
          _
        %s1339 = sand.u32 %s254, 1
        %s1340 = scalar_lea.sflag [#allocation7], %s1339
        %s1341 = sand.u32 %s254, 1
        %s1342 = smul.addr %s1341, 64
        %s1343 = scalar_lea.vmem [#allocation15], %s1342
        // Predicated region
        $region101: #{tpu_custom_call.1} parent=55 // pred_check
          %p1344 = pneg %p264
        $region102: #{tpu_custom_call.1} parent=55 // pred_check_branch
          %1346 = sbr.rel (%p1344) target = $region104
        $region103: #{tpu_custom_call.1} parent=55 // pred_region
          %s1347 = smul.u32 8, %s35
          %s1349 = ssub.s32 1024, 1024
          %1350 = vsyncadd %s1340, %s1349
          %s1351 = smul.addr %s1347, 128
          %s1352 = scalar_lea.hbm %s9, %s1351
          %s1353 = sshll.u32 %s1343, 4
          %s1354 = int_to_ptr.vmem [resolvable:$true] %s1353
          %1359 = dma.vmem_to_hbm [thread:$0]  %s1354, 1024, %s1352, %s1340, 128, 128, 8
        $region104: #{tpu_custom_call.1} parent=55 // pred_fallthru
          _
      $region56: #{tpu_custom_call.1} parent=5 // pred_fallthru
        _
      %p1360 = scmp.le.s32.totalorder 2, %s25
      // Predicated region
      $region105: #{tpu_custom_call.1} parent=5 // pred_check
        %p1361 = pneg %p1360
      $region106: #{tpu_custom_call.1} parent=5 // pred_check_branch
        %1363 = sbr.rel (%p1361) target = $region108
      $region107: #{tpu_custom_call.1} parent=5 // pred_region
        %s1364 = ssub.s32 %s25, 2
        // Predicated region
        $region109: #{tpu_custom_call.1} parent=107 // pred_check
          %p1365 = pneg %p270
        $region110: #{tpu_custom_call.1} parent=107 // pred_check_branch
          %1367 = sbr.rel (%p1365) target = $region112
        $region111: #{tpu_custom_call.1} parent=107 // pred_region
          %s1368 = sand.u32 %s255, 1
          %s1369 = scalar_lea.sflag [#allocation7], %s1368
          %s1370 = sand.u32 %s255, 1
          %s1371 = smul.addr %s1370, 64
          %s1372 = scalar_lea.vmem [#allocation15], %s1371
          %1373 = dma.done %s1369, 1024
        $region112: #{tpu_custom_call.1} parent=107 // pred_fallthru
          _
      $region108: #{tpu_custom_call.1} parent=5 // pred_fallthru
        _
    $region6: #{tpu_custom_call.1} parent=1 // loop_footer
      %s29 = sadd.s32 1, %s25
    $region7: #{tpu_custom_call.1} parent=1 // loop_footer_branch
      %24 = sbr.rel target = $region3
    $region8: #{tpu_custom_call.1} parent=1 // loop_exit
      _
    %1374 = vsyncpa [#allocation6], 1
    %s1375 = scalar_lea.sflag [#allocation6], 1
    %1376 = vsyncpa %s1375, 1
    %1377 = vsyncpa [#allocation9], 1
    %s1378 = scalar_lea.sflag [#allocation9], 1
    %1379 = vsyncpa %s1378, 1
    %1380 = vsyncpa [#allocation12], 1
    %1381 = vsyncpa [#allocation7], 1
    %s1382 = scalar_lea.sflag [#allocation7], 1
    %1383 = vsyncpa %s1382, 1

</llo_original>
